<compile_context>
chip_gen: v7x
topology: tpu7x:2x2x1
jax: 0.10.0
libtpu: 0.0.40
codegen_flags: <defaults>
</compile_context>

<pallas_src>
import jax
import jax.numpy as jnp
from jax.experimental import pallas as pl
from jax.experimental.pallas import tpu as pltpu


# ----------------------------------------------------------------------------
# Tiling helper: biggest tile <= max_tile that evenly divides `dim`; a block
# equal to the full array dim is always legal, so small dims are never padded.
# ----------------------------------------------------------------------------
def _pick_tile(dim, max_tile):
    if dim <= max_tile:
        return dim
    for t in (max_tile, max_tile // 2, 256, 128, 64, 32, 16, 8):
        if 0 < t <= max_tile and dim % t == 0:
            return t
    return dim


# ----------------------------------------------------------------------------
# Pallas kernel 1: bf16 GEMM (f32 accumulation) + fused BatchNorm statistics.
#   outputs: y = a @ b (f32), col_sum = sum_M(y), col_sumsq = sum_M(y*y)
# ----------------------------------------------------------------------------
def _matmul_stats_kernel(a_ref, b_ref, y_ref, s_ref, ss_ref, acc_ref):
    i = pl.program_id(0)          # M blocks
    k = pl.program_id(1)          # K blocks (reduction)
    nk = pl.num_programs(1)

    @pl.when(jnp.logical_and(i == 0, k == 0))
    def _():
        s_ref[...] = jnp.zeros_like(s_ref)
        ss_ref[...] = jnp.zeros_like(ss_ref)

    @pl.when(k == 0)
    def _():
        acc_ref[...] = jnp.zeros_like(acc_ref)

    acc_ref[...] += jnp.dot(a_ref[...], b_ref[...],
                            preferred_element_type=jnp.float32)

    @pl.when(k == nk - 1)
    def _():
        y = acc_ref[...]
        y_ref[...] = y.astype(y_ref.dtype)
        s_ref[...] += jnp.sum(y, axis=0, keepdims=True)
        ss_ref[...] += jnp.sum(y * y, axis=0, keepdims=True)


def matmul_bn_stats(a, b, *, max_tm=256, max_tk=512):
    """(M, K) bf16 @ (K, N) bf16 -> y (M, N) f32, col_sum (1, N), col_sumsq (1, N)."""
    M, K = a.shape
    K2, N = b.shape
    assert K == K2
    tm = _pick_tile(M, max_tm)
    tk = _pick_tile(K, max_tk)          # tk divides K or equals K exactly
    grid = (M // tm, K // tk)

    return pl.pallas_call(
        _matmul_stats_kernel,
        out_shape=(
            jax.ShapeDtypeStruct((M, N), jnp.float32),
            jax.ShapeDtypeStruct((1, N), jnp.float32),
            jax.ShapeDtypeStruct((1, N), jnp.float32),
        ),
        grid_spec=pltpu.PrefetchScalarGridSpec(
            num_scalar_prefetch=0,
            grid=grid,
            in_specs=[
                pl.BlockSpec((tm, tk), lambda i, k: (i, k)),
                pl.BlockSpec((tk, N), lambda i, k: (k, 0)),
            ],
            out_specs=(
                pl.BlockSpec((tm, N), lambda i, k: (i, 0)),
                pl.BlockSpec((1, N), lambda i, k: (0, 0)),   # resident whole grid
                pl.BlockSpec((1, N), lambda i, k: (0, 0)),   # resident whole grid
            ),
            scratch_shapes=[pltpu.VMEM((tm, N), jnp.float32)],
        ),
        compiler_params=pltpu.CompilerParams(
            # K is a reduction for y; M is a reduction for the BN-stat outputs.
            dimension_semantics=("arbitrary", "arbitrary"),
        ),
    )(a, b)


# ----------------------------------------------------------------------------
# Pallas kernel 2: fused BatchNorm affine + ReLU, tiled over rows.
# ----------------------------------------------------------------------------
def _affine_relu_kernel(x_ref, s_ref, t_ref, o_ref):
    o_ref[...] = jnp.maximum(
        x_ref[...] * s_ref[...] + t_ref[...], 0.0
    ).astype(o_ref.dtype)


def affine_relu(x, scale, shift, *, out_dtype, max_tm=512):
    """relu(x * scale + shift) with per-column scale/shift.  x: (M, C) f32."""
    M, C = x.shape
    tm = _pick_tile(M, max_tm)
    return pl.pallas_call(
        _affine_relu_kernel,
        out_shape=jax.ShapeDtypeStruct((M, C), out_dtype),
        grid_spec=pltpu.PrefetchScalarGridSpec(
            num_scalar_prefetch=0,
            grid=(M // tm,),
            in_specs=[
                pl.BlockSpec((tm, C), lambda i: (i, 0)),
                pl.BlockSpec((1, C), lambda i: (0, 0)),
                pl.BlockSpec((1, C), lambda i: (0, 0)),
            ],
            out_specs=pl.BlockSpec((tm, C), lambda i: (i, 0)),
        ),
        compiler_params=pltpu.CompilerParams(
            dimension_semantics=("parallel",),
        ),
    )(x, scale.reshape(1, C), shift.reshape(1, C))


# ----------------------------------------------------------------------------
# Layers (NHWC internally)
# ----------------------------------------------------------------------------
def conv3x3_bn_relu(x, w_flat, gamma, beta, *, out_dtype, eps=1e-5):
    """Conv2d(3x3, pad=1, bias=False) -> BatchNorm2d (training-mode batch stats) -> ReLU."""
    B, H, W, Cin = x.shape
    Cout = w_flat.shape[1]

    # im2col patches built directly in bf16; (ky, kx, cin) ordering matches the
    # (2,3,1,0)-flattened weights.
    xb = x.astype(jnp.bfloat16)
    xp = jnp.pad(xb, ((0, 0), (1, 1), (1, 1), (0, 0)))
    patches = jnp.concatenate(
        [xp[:, ky:ky + H, kx:kx + W, :] for ky in range(3) for kx in range(3)],
        axis=-1,
    ).reshape(B * H * W, 9 * Cin)

    y, col_sum, col_ssq = matmul_bn_stats(patches, w_flat)

    m = float(B * H * W)
    mean = col_sum[0] / m
    var = jnp.maximum(col_ssq[0] / m - mean * mean, 0.0)   # biased batch variance
    scale = gamma / jnp.sqrt(var + eps)
    shift = beta - mean * scale

    out = affine_relu(y, scale, shift, out_dtype=out_dtype)
    return out.reshape(B, H, W, Cout)


def double_conv(x, p):
    # intermediate activation in bf16 (feeds the next conv's bf16 patches),
    # final activation back to f32 (module output dtype, matches torch).
    x = conv3x3_bn_relu(x, p["w1"], p["g1"], p["b1"], out_dtype=jnp.bfloat16)
    x = conv3x3_bn_relu(x, p["w2"], p["g2"], p["b2"], out_dtype=jnp.float32)
    return x


def maxpool2(x):
    B, H, W, C = x.shape
    return jnp.max(x.reshape(B, H // 2, 2, W // 2, 2, C), axis=(2, 4))


@jax.jit
def down_forward(params, x_nchw):
    """Down: MaxPool2d(2) -> DoubleConv.  x: (B, Cin, H, W) f32 -> (B, Cout, H/2, W/2)."""
    x = jnp.transpose(x_nchw, (0, 2, 3, 1))       # NHWC
    x = maxpool2(x)
    x = double_conv(x, params)
    return jnp.transpose(x, (0, 3, 1, 2))         # back to NCHW


# ----------------------------------------------------------------------------
# Parameters (shapes mirror the torch module); weight prep hoisted out of jit.
# ----------------------------------------------------------------------------
def init_raw_params(key, cin, cout, cmid=None):
    cmid = cmid or cout
    k1, k2 = jax.random.split(key)
    return dict(
        w1=(0.1 * jax.random.normal(k1, (cmid, cin, 3, 3))).astype(jnp.float32),
        g1=jnp.ones((cmid,), jnp.float32),
        b1=jnp.zeros((cmid,), jnp.float32),
        w2=(0.1 * jax.random.normal(k2, (cout, cmid, 3, 3))).astype(jnp.float32),
        g2=jnp.ones((cout,), jnp.float32),
        b2=jnp.zeros((cout,), jnp.float32),
    )


def prepare_params(raw):
    """One-time weight flatten/transpose/cast (outside the jitted hot path)."""
    def flat(w):  # (Cout, Cin, 3, 3) -> (9*Cin, Cout) bf16, (ky,kx,ci) row order
        cout, cin = w.shape[0], w.shape[1]
        return jnp.transpose(w, (2, 3, 1, 0)).reshape(9 * cin, cout).astype(jnp.bfloat16)

    return dict(
        w1=flat(raw["w1"]), g1=raw["g1"].astype(jnp.float32), b1=raw["b1"].astype(jnp.float32),
        w2=flat(raw["w2"]), g2=raw["g2"].astype(jnp.float32), b2=raw["b2"].astype(jnp.float32),
    )


if __name__ == "__main__":
    key = jax.random.PRNGKey(0)
    pkey, xkey = jax.random.split(key)

    B, Cin, Cout, H, W = 2, 4, 8, 16, 16
    params = prepare_params(init_raw_params(pkey, Cin, Cout))
    x = jax.random.normal(xkey, (B, Cin, H, W), dtype=jnp.float32)   # NCHW like torch

    out = down_forward(params, x)
    out = jax.block_until_ready(out)

    assert out.shape == (B, Cout, H // 2, W // 2), out.shape
    assert bool(jnp.all(jnp.isfinite(out)))
    print("KERNEL_OK")
</pallas_src>

<mosaic_0001>
module attributes {stable_mosaic.version = 11 : i64} {
  func.func @_affine_relu_kernel(%arg0: i32, %arg1: memref<128x8xf32, #tpu.memory_space<vmem>>, %arg2: memref<1x8xf32, #tpu.memory_space<vmem>>, %arg3: memref<1x8xf32, #tpu.memory_space<vmem>>, %arg4: memref<128x8xbf16, #tpu.memory_space<vmem>>) attributes {dimension_semantics = [#tpu.dimension_semantics<parallel>], iteration_bounds = array<i64: 1>, scalar_prefetch = 0 : i64, scratch_operands = 0 : i64, tpu.core_type = #tpu.core_type<tc>, window_params = [{transform_indices = @transform_0, window_bounds = array<i64: 128, 8>}, {pipeline_mode = #tpu.pipeline_mode<synchronous>, transform_indices = @transform_1, window_bounds = array<i64: 1, 8>}, {pipeline_mode = #tpu.pipeline_mode<synchronous>, transform_indices = @transform_2, window_bounds = array<i64: 1, 8>}, {transform_indices = @transform_3, window_bounds = array<i64: 128, 8>}]} {
    %c0 = arith.constant 0 : index
    %c0_0 = arith.constant 0 : index
    %0 = vector.load %arg1[%c0, %c0_0] : memref<128x8xf32, #tpu.memory_space<vmem>>, vector<128x8xf32>
    %c0_1 = arith.constant 0 : index
    %c0_2 = arith.constant 0 : index
    %1 = vector.load %arg2[%c0_1, %c0_2] : memref<1x8xf32, #tpu.memory_space<vmem>>, vector<1x8xf32>
    %2 = vector.broadcast %1 : vector<1x8xf32> to vector<128x8xf32>
    %3 = arith.mulf %0, %2 : vector<128x8xf32>
    %c0_3 = arith.constant 0 : index
    %c0_4 = arith.constant 0 : index
    %4 = vector.load %arg3[%c0_3, %c0_4] : memref<1x8xf32, #tpu.memory_space<vmem>>, vector<1x8xf32>
    %5 = vector.broadcast %4 : vector<1x8xf32> to vector<128x8xf32>
    %6 = arith.addf %3, %5 : vector<128x8xf32>
    %cst = arith.constant 0.000000e+00 : f32
    %7 = vector.broadcast %cst : f32 to vector<128x8xf32>
    %8 = arith.maximumf %6, %7 : vector<128x8xf32>
    %9 = arith.truncf %8 : vector<128x8xf32> to vector<128x8xbf16>
    %c0_5 = arith.constant 0 : index
    %c0_6 = arith.constant 0 : index
    %10 = vector.load %arg4[%c0_5, %c0_6] : memref<128x8xbf16, #tpu.memory_space<vmem>>, vector<128x8xbf16>
    tpu.vector_store %arg4[%c0_5, %c0_6], %9 {strides = array<i32>} : memref<128x8xbf16, #tpu.memory_space<vmem>>, vector<128x8xbf16>,
    return
  }
  func.func @transform_0(%arg0: i32) -> (i32, i32) {
    %c0_i32 = arith.constant 0 : i32
    %c0_i32_0 = arith.constant 0 : i32
    return %arg0, %c0_i32 : i32, i32
  }
  func.func @transform_1(%arg0: i32) -> (i32, i32) {
    %c0_i32 = arith.constant 0 : i32
    %c0_i32_0 = arith.constant 0 : i32
    %c0_i32_1 = arith.constant 0 : i32
    return %c0_i32, %c0_i32_0 : i32, i32
  }
  func.func @transform_2(%arg0: i32) -> (i32, i32) {
    %c0_i32 = arith.constant 0 : i32
    %c0_i32_0 = arith.constant 0 : i32
    %c0_i32_1 = arith.constant 0 : i32
    return %c0_i32, %c0_i32_0 : i32, i32
  }
  func.func @transform_3(%arg0: i32) -> (i32, i32) {
    %c0_i32 = arith.constant 0 : i32
    %c0_i32_0 = arith.constant 0 : i32
    return %arg0, %c0_i32 : i32, i32
  }
}

module attributes {stable_mosaic.version = 11 : i64} {
  func.func @_matmul_stats_kernel(%arg0: i32, %arg1: i32, %arg2: memref<128x36xbf16, #tpu.memory_space<vmem>>, %arg3: memref<36x8xbf16, #tpu.memory_space<vmem>>, %arg4: memref<128x8xf32, #tpu.memory_space<vmem>>, %arg5: memref<1x8xf32, #tpu.memory_space<vmem>>, %arg6: memref<1x8xf32, #tpu.memory_space<vmem>>, %arg7: memref<128x8xf32, #tpu.memory_space<vmem>>) attributes {dimension_semantics = [#tpu.dimension_semantics<arbitrary>, #tpu.dimension_semantics<arbitrary>], iteration_bounds = array<i64: 1, 1>, scalar_prefetch = 0 : i64, scratch_operands = 1 : i64, tpu.core_type = #tpu.core_type<tc>, window_params = [{transform_indices = @transform_0, window_bounds = array<i64: 128, 36>}, {transform_indices = @transform_1, window_bounds = array<i64: 36, 8>}, {transform_indices = @transform_2, window_bounds = array<i64: 128, 8>}, {pipeline_mode = #tpu.pipeline_mode<synchronous>, transform_indices = @transform_3, window_bounds = array<i64: 1, 8>}, {pipeline_mode = #tpu.pipeline_mode<synchronous>, transform_indices = @transform_4, window_bounds = array<i64: 1, 8>}]} {
    %c0_i32 = arith.constant 0 : i32
    %0 = arith.cmpi eq, %arg0, %c0_i32 : i32
    %c0_i32_0 = arith.constant 0 : i32
    %1 = arith.cmpi eq, %arg1, %c0_i32_0 : i32
    %2 = arith.andi %0, %1 : i1
    %3 = arith.extui %2 : i1 to i32
    %c0_i32_1 = arith.constant 0 : i32
    %4 = arith.cmpi ne, %3, %c0_i32_1 : i32
    scf.if %4 {
      %cst_13 = arith.constant 0.000000e+00 : f32
      %17 = vector.broadcast %cst_13 : f32 to vector<1x8xf32>
      %c0_14 = arith.constant 0 : index
      %c0_15 = arith.constant 0 : index
      %18 = vector.load %arg5[%c0_14, %c0_15] : memref<1x8xf32, #tpu.memory_space<vmem>>, vector<1x8xf32>
      tpu.vector_store %arg5[%c0_14, %c0_15], %17 {strides = array<i32>} : memref<1x8xf32, #tpu.memory_space<vmem>>, vector<1x8xf32>,
      %cst_16 = arith.constant 0.000000e+00 : f32
      %19 = vector.broadcast %cst_16 : f32 to vector<1x8xf32>
      %c0_17 = arith.constant 0 : index
      %c0_18 = arith.constant 0 : index
      %20 = vector.load %arg6[%c0_17, %c0_18] : memref<1x8xf32, #tpu.memory_space<vmem>>, vector<1x8xf32>
      tpu.vector_store %arg6[%c0_17, %c0_18], %19 {strides = array<i32>} : memref<1x8xf32, #tpu.memory_space<vmem>>, vector<1x8xf32>,
    } else {
    }
    %c0_i32_2 = arith.constant 0 : i32
    %5 = arith.cmpi eq, %arg1, %c0_i32_2 : i32
    %6 = arith.extui %5 : i1 to i32
    %c0_i32_3 = arith.constant 0 : i32
    %7 = arith.cmpi ne, %6, %c0_i32_3 : i32
    scf.if %7 {
      %cst_13 = arith.constant 0.000000e+00 : f32
      %17 = vector.broadcast %cst_13 : f32 to vector<128x8xf32>
      %c0_14 = arith.constant 0 : index
      %c0_15 = arith.constant 0 : index
      %18 = vector.load %arg7[%c0_14, %c0_15] : memref<128x8xf32, #tpu.memory_space<vmem>>, vector<128x8xf32>
      tpu.vector_store %arg7[%c0_14, %c0_15], %17 {strides = array<i32>} : memref<128x8xf32, #tpu.memory_space<vmem>>, vector<128x8xf32>,
    } else {
    }
    %c0 = arith.constant 0 : index
    %c0_4 = arith.constant 0 : index
    %8 = vector.load %arg7[%c0, %c0_4] : memref<128x8xf32, #tpu.memory_space<vmem>>, vector<128x8xf32>
    %c0_5 = arith.constant 0 : index
    %c0_6 = arith.constant 0 : index
    %9 = vector.load %arg2[%c0_5, %c0_6] : memref<128x36xbf16, #tpu.memory_space<vmem>>, vector<128x36xbf16>
    %c0_7 = arith.constant 0 : index
    %c0_8 = arith.constant 0 : index
    %10 = vector.load %arg3[%c0_7, %c0_8] : memref<36x8xbf16, #tpu.memory_space<vmem>>, vector<36x8xbf16>
    %cst = arith.constant dense<0.000000e+00> : vector<128x8xf32>
    %11 = tpu.matmul %9, %10, %cst {dimension_numbers = #tpu.dot_dimension_numbers<[1], [0], [0], [1], [0, 0, 1, 1], [], []>} : vector<128x36xbf16>, vector<36x8xbf16>, vector<128x8xf32> -> vector<128x8xf32>
    %12 = arith.addf %8, %11 : vector<128x8xf32>
    %c0_9 = arith.constant 0 : index
    %c0_10 = arith.constant 0 : index
    %13 = vector.load %arg7[%c0_9, %c0_10] : memref<128x8xf32, #tpu.memory_space<vmem>>, vector<128x8xf32>
    tpu.vector_store %arg7[%c0_9, %c0_10], %12 {strides = array<i32>} : memref<128x8xf32, #tpu.memory_space<vmem>>, vector<128x8xf32>,
    %c0_i32_11 = arith.constant 0 : i32
    %14 = arith.cmpi eq, %arg1, %c0_i32_11 : i32
    %15 = arith.extui %14 : i1 to i32
    %c0_i32_12 = arith.constant 0 : i32
    %16 = arith.cmpi ne, %15, %c0_i32_12 : i32
    scf.if %16 {
      %c0_13 = arith.constant 0 : index
      %c0_14 = arith.constant 0 : index
      %17 = vector.load %arg7[%c0_13, %c0_14] : memref<128x8xf32, #tpu.memory_space<vmem>>, vector<128x8xf32>
      %c0_15 = arith.constant 0 : index
      %c0_16 = arith.constant 0 : index
      %18 = vector.load %arg4[%c0_15, %c0_16] : memref<128x8xf32, #tpu.memory_space<vmem>>, vector<128x8xf32>
      tpu.vector_store %arg4[%c0_15, %c0_16], %17 {strides = array<i32>} : memref<128x8xf32, #tpu.memory_space<vmem>>, vector<128x8xf32>,
      %c0_17 = arith.constant 0 : index
      %c0_18 = arith.constant 0 : index
      %19 = vector.load %arg5[%c0_17, %c0_18] : memref<1x8xf32, #tpu.memory_space<vmem>>, vector<1x8xf32>
      %cst_19 = arith.constant dense<0.000000e+00> : vector<8xf32>
      %20 = vector.multi_reduction <add>, %17, %cst_19 [0] : vector<128x8xf32> to vector<8xf32>
      %21 = vector.shape_cast %20 : vector<8xf32> to vector<1x8xf32>
      %22 = arith.addf %19, %21 : vector<1x8xf32>
      %c0_20 = arith.constant 0 : index
      %c0_21 = arith.constant 0 : index
      %23 = vector.load %arg5[%c0_20, %c0_21] : memref<1x8xf32, #tpu.memory_space<vmem>>, vector<1x8xf32>
      tpu.vector_store %arg5[%c0_20, %c0_21], %22 {strides = array<i32>} : memref<1x8xf32, #tpu.memory_space<vmem>>, vector<1x8xf32>,
      %c0_22 = arith.constant 0 : index
      %c0_23 = arith.constant 0 : index
      %24 = vector.load %arg6[%c0_22, %c0_23] : memref<1x8xf32, #tpu.memory_space<vmem>>, vector<1x8xf32>
      %25 = arith.mulf %17, %17 : vector<128x8xf32>
      %cst_24 = arith.constant dense<0.000000e+00> : vector<8xf32>
      %26 = vector.multi_reduction <add>, %25, %cst_24 [0] : vector<128x8xf32> to vector<8xf32>
      %27 = vector.shape_cast %26 : vector<8xf32> to vector<1x8xf32>
      %28 = arith.addf %24, %27 : vector<1x8xf32>
      %c0_25 = arith.constant 0 : index
      %c0_26 = arith.constant 0 : index
      %29 = vector.load %arg6[%c0_25, %c0_26] : memref<1x8xf32, #tpu.memory_space<vmem>>, vector<1x8xf32>
      tpu.vector_store %arg6[%c0_25, %c0_26], %28 {strides = array<i32>} : memref<1x8xf32, #tpu.memory_space<vmem>>, vector<1x8xf32>,
    } else {
    }
    return
  }
  func.func @transform_0(%arg0: i32, %arg1: i32) -> (i32, i32) {
    %c0_i32 = arith.constant 0 : i32
    return %arg0, %arg1 : i32, i32
  }
  func.func @transform_1(%arg0: i32, %arg1: i32) -> (i32, i32) {
    %c0_i32 = arith.constant 0 : i32
    %c0_i32_0 = arith.constant 0 : i32
    return %arg1, %c0_i32 : i32, i32
  }
  func.func @transform_2(%arg0: i32, %arg1: i32) -> (i32, i32) {
    %c0_i32 = arith.constant 0 : i32
    %c0_i32_0 = arith.constant 0 : i32
    return %arg0, %c0_i32 : i32, i32
  }
  func.func @transform_3(%arg0: i32, %arg1: i32) -> (i32, i32) {
    %c0_i32 = arith.constant 0 : i32
    %c0_i32_0 = arith.constant 0 : i32
    %c0_i32_1 = arith.constant 0 : i32
    return %c0_i32, %c0_i32_0 : i32, i32
  }
  func.func @transform_4(%arg0: i32, %arg1: i32) -> (i32, i32) {
    %c0_i32 = arith.constant 0 : i32
    %c0_i32_0 = arith.constant 0 : i32
    %c0_i32_1 = arith.constant 0 : i32
    return %c0_i32, %c0_i32_0 : i32, i32
  }
}

module attributes {stable_mosaic.version = 11 : i64} {
  func.func @_matmul_stats_kernel(%arg0: i32, %arg1: i32, %arg2: memref<128x72xbf16, #tpu.memory_space<vmem>>, %arg3: memref<72x8xbf16, #tpu.memory_space<vmem>>, %arg4: memref<128x8xf32, #tpu.memory_space<vmem>>, %arg5: memref<1x8xf32, #tpu.memory_space<vmem>>, %arg6: memref<1x8xf32, #tpu.memory_space<vmem>>, %arg7: memref<128x8xf32, #tpu.memory_space<vmem>>) attributes {dimension_semantics = [#tpu.dimension_semantics<arbitrary>, #tpu.dimension_semantics<arbitrary>], iteration_bounds = array<i64: 1, 1>, scalar_prefetch = 0 : i64, scratch_operands = 1 : i64, tpu.core_type = #tpu.core_type<tc>, window_params = [{transform_indices = @transform_0, window_bounds = array<i64: 128, 72>}, {transform_indices = @transform_1, window_bounds = array<i64: 72, 8>}, {transform_indices = @transform_2, window_bounds = array<i64: 128, 8>}, {pipeline_mode = #tpu.pipeline_mode<synchronous>, transform_indices = @transform_3, window_bounds = array<i64: 1, 8>}, {pipeline_mode = #tpu.pipeline_mode<synchronous>, transform_indices = @transform_4, window_bounds = array<i64: 1, 8>}]} {
    %c0_i32 = arith.constant 0 : i32
    %0 = arith.cmpi eq, %arg0, %c0_i32 : i32
    %c0_i32_0 = arith.constant 0 : i32
    %1 = arith.cmpi eq, %arg1, %c0_i32_0 : i32
    %2 = arith.andi %0, %1 : i1
    %3 = arith.extui %2 : i1 to i32
    %c0_i32_1 = arith.constant 0 : i32
    %4 = arith.cmpi ne, %3, %c0_i32_1 : i32
    scf.if %4 {
      %cst_13 = arith.constant 0.000000e+00 : f32
      %17 = vector.broadcast %cst_13 : f32 to vector<1x8xf32>
      %c0_14 = arith.constant 0 : index
      %c0_15 = arith.constant 0 : index
      %18 = vector.load %arg5[%c0_14, %c0_15] : memref<1x8xf32, #tpu.memory_space<vmem>>, vector<1x8xf32>
      tpu.vector_store %arg5[%c0_14, %c0_15], %17 {strides = array<i32>} : memref<1x8xf32, #tpu.memory_space<vmem>>, vector<1x8xf32>,
      %cst_16 = arith.constant 0.000000e+00 : f32
      %19 = vector.broadcast %cst_16 : f32 to vector<1x8xf32>
      %c0_17 = arith.constant 0 : index
      %c0_18 = arith.constant 0 : index
      %20 = vector.load %arg6[%c0_17, %c0_18] : memref<1x8xf32, #tpu.memory_space<vmem>>, vector<1x8xf32>
      tpu.vector_store %arg6[%c0_17, %c0_18], %19 {strides = array<i32>} : memref<1x8xf32, #tpu.memory_space<vmem>>, vector<1x8xf32>,
    } else {
    }
    %c0_i32_2 = arith.constant 0 : i32
    %5 = arith.cmpi eq, %arg1, %c0_i32_2 : i32
    %6 = arith.extui %5 : i1 to i32
    %c0_i32_3 = arith.constant 0 : i32
    %7 = arith.cmpi ne, %6, %c0_i32_3 : i32
    scf.if %7 {
      %cst_13 = arith.constant 0.000000e+00 : f32
      %17 = vector.broadcast %cst_13 : f32 to vector<128x8xf32>
      %c0_14 = arith.constant 0 : index
      %c0_15 = arith.constant 0 : index
      %18 = vector.load %arg7[%c0_14, %c0_15] : memref<128x8xf32, #tpu.memory_space<vmem>>, vector<128x8xf32>
      tpu.vector_store %arg7[%c0_14, %c0_15], %17 {strides = array<i32>} : memref<128x8xf32, #tpu.memory_space<vmem>>, vector<128x8xf32>,
    } else {
    }
    %c0 = arith.constant 0 : index
    %c0_4 = arith.constant 0 : index
    %8 = vector.load %arg7[%c0, %c0_4] : memref<128x8xf32, #tpu.memory_space<vmem>>, vector<128x8xf32>
    %c0_5 = arith.constant 0 : index
    %c0_6 = arith.constant 0 : index
    %9 = vector.load %arg2[%c0_5, %c0_6] : memref<128x72xbf16, #tpu.memory_space<vmem>>, vector<128x72xbf16>
    %c0_7 = arith.constant 0 : index
    %c0_8 = arith.constant 0 : index
    %10 = vector.load %arg3[%c0_7, %c0_8] : memref<72x8xbf16, #tpu.memory_space<vmem>>, vector<72x8xbf16>
    %cst = arith.constant dense<0.000000e+00> : vector<128x8xf32>
    %11 = tpu.matmul %9, %10, %cst {dimension_numbers = #tpu.dot_dimension_numbers<[1], [0], [0], [1], [0, 0, 1, 1], [], []>} : vector<128x72xbf16>, vector<72x8xbf16>, vector<128x8xf32> -> vector<128x8xf32>
    %12 = arith.addf %8, %11 : vector<128x8xf32>
    %c0_9 = arith.constant 0 : index
    %c0_10 = arith.constant 0 : index
    %13 = vector.load %arg7[%c0_9, %c0_10] : memref<128x8xf32, #tpu.memory_space<vmem>>, vector<128x8xf32>
    tpu.vector_store %arg7[%c0_9, %c0_10], %12 {strides = array<i32>} : memref<128x8xf32, #tpu.memory_space<vmem>>, vector<128x8xf32>,
    %c0_i32_11 = arith.constant 0 : i32
    %14 = arith.cmpi eq, %arg1, %c0_i32_11 : i32
    %15 = arith.extui %14 : i1 to i32
    %c0_i32_12 = arith.constant 0 : i32
    %16 = arith.cmpi ne, %15, %c0_i32_12 : i32
    scf.if %16 {
      %c0_13 = arith.constant 0 : index
      %c0_14 = arith.constant 0 : index
      %17 = vector.load %arg7[%c0_13, %c0_14] : memref<128x8xf32, #tpu.memory_space<vmem>>, vector<128x8xf32>
      %c0_15 = arith.constant 0 : index
      %c0_16 = arith.constant 0 : index
      %18 = vector.load %arg4[%c0_15, %c0_16] : memref<128x8xf32, #tpu.memory_space<vmem>>, vector<128x8xf32>
      tpu.vector_store %arg4[%c0_15, %c0_16], %17 {strides = array<i32>} : memref<128x8xf32, #tpu.memory_space<vmem>>, vector<128x8xf32>,
      %c0_17 = arith.constant 0 : index
      %c0_18 = arith.constant 0 : index
      %19 = vector.load %arg5[%c0_17, %c0_18] : memref<1x8xf32, #tpu.memory_space<vmem>>, vector<1x8xf32>
      %cst_19 = arith.constant dense<0.000000e+00> : vector<8xf32>
      %20 = vector.multi_reduction <add>, %17, %cst_19 [0] : vector<128x8xf32> to vector<8xf32>
      %21 = vector.shape_cast %20 : vector<8xf32> to vector<1x8xf32>
      %22 = arith.addf %19, %21 : vector<1x8xf32>
      %c0_20 = arith.constant 0 : index
      %c0_21 = arith.constant 0 : index
      %23 = vector.load %arg5[%c0_20, %c0_21] : memref<1x8xf32, #tpu.memory_space<vmem>>, vector<1x8xf32>
      tpu.vector_store %arg5[%c0_20, %c0_21], %22 {strides = array<i32>} : memref<1x8xf32, #tpu.memory_space<vmem>>, vector<1x8xf32>,
      %c0_22 = arith.constant 0 : index
      %c0_23 = arith.constant 0 : index
      %24 = vector.load %arg6[%c0_22, %c0_23] : memref<1x8xf32, #tpu.memory_space<vmem>>, vector<1x8xf32>
      %25 = arith.mulf %17, %17 : vector<128x8xf32>
      %cst_24 = arith.constant dense<0.000000e+00> : vector<8xf32>
      %26 = vector.multi_reduction <add>, %25, %cst_24 [0] : vector<128x8xf32> to vector<8xf32>
      %27 = vector.shape_cast %26 : vector<8xf32> to vector<1x8xf32>
      %28 = arith.addf %24, %27 : vector<1x8xf32>
      %c0_25 = arith.constant 0 : index
      %c0_26 = arith.constant 0 : index
      %29 = vector.load %arg6[%c0_25, %c0_26] : memref<1x8xf32, #tpu.memory_space<vmem>>, vector<1x8xf32>
      tpu.vector_store %arg6[%c0_25, %c0_26], %28 {strides = array<i32>} : memref<1x8xf32, #tpu.memory_space<vmem>>, vector<1x8xf32>,
    } else {
    }
    return
  }
  func.func @transform_0(%arg0: i32, %arg1: i32) -> (i32, i32) {
    %c0_i32 = arith.constant 0 : i32
    return %arg0, %arg1 : i32, i32
  }
  func.func @transform_1(%arg0: i32, %arg1: i32) -> (i32, i32) {
    %c0_i32 = arith.constant 0 : i32
    %c0_i32_0 = arith.constant 0 : i32
    return %arg1, %c0_i32 : i32, i32
  }
  func.func @transform_2(%arg0: i32, %arg1: i32) -> (i32, i32) {
    %c0_i32 = arith.constant 0 : i32
    %c0_i32_0 = arith.constant 0 : i32
    return %arg0, %c0_i32 : i32, i32
  }
  func.func @transform_3(%arg0: i32, %arg1: i32) -> (i32, i32) {
    %c0_i32 = arith.constant 0 : i32
    %c0_i32_0 = arith.constant 0 : i32
    %c0_i32_1 = arith.constant 0 : i32
    return %c0_i32, %c0_i32_0 : i32, i32
  }
  func.func @transform_4(%arg0: i32, %arg1: i32) -> (i32, i32) {
    %c0_i32 = arith.constant 0 : i32
    %c0_i32_0 = arith.constant 0 : i32
    %c0_i32_1 = arith.constant 0 : i32
    return %c0_i32, %c0_i32_0 : i32, i32
  }
}

module attributes {stable_mosaic.version = 11 : i64} {
  func.func @_affine_relu_kernel(%arg0: i32, %arg1: memref<128x8xf32, #tpu.memory_space<vmem>>, %arg2: memref<1x8xf32, #tpu.memory_space<vmem>>, %arg3: memref<1x8xf32, #tpu.memory_space<vmem>>, %arg4: memref<128x8xf32, #tpu.memory_space<vmem>>) attributes {dimension_semantics = [#tpu.dimension_semantics<parallel>], iteration_bounds = array<i64: 1>, scalar_prefetch = 0 : i64, scratch_operands = 0 : i64, tpu.core_type = #tpu.core_type<tc>, window_params = [{transform_indices = @transform_0, window_bounds = array<i64: 128, 8>}, {pipeline_mode = #tpu.pipeline_mode<synchronous>, transform_indices = @transform_1, window_bounds = array<i64: 1, 8>}, {pipeline_mode = #tpu.pipeline_mode<synchronous>, transform_indices = @transform_2, window_bounds = array<i64: 1, 8>}, {transform_indices = @transform_3, window_bounds = array<i64: 128, 8>}]} {
    %c0 = arith.constant 0 : index
    %c0_0 = arith.constant 0 : index
    %0 = vector.load %arg1[%c0, %c0_0] : memref<128x8xf32, #tpu.memory_space<vmem>>, vector<128x8xf32>
    %c0_1 = arith.constant 0 : index
    %c0_2 = arith.constant 0 : index
    %1 = vector.load %arg2[%c0_1, %c0_2] : memref<1x8xf32, #tpu.memory_space<vmem>>, vector<1x8xf32>
    %2 = vector.broadcast %1 : vector<1x8xf32> to vector<128x8xf32>
    %3 = arith.mulf %0, %2 : vector<128x8xf32>
    %c0_3 = arith.constant 0 : index
    %c0_4 = arith.constant 0 : index
    %4 = vector.load %arg3[%c0_3, %c0_4] : memref<1x8xf32, #tpu.memory_space<vmem>>, vector<1x8xf32>
    %5 = vector.broadcast %4 : vector<1x8xf32> to vector<128x8xf32>
    %6 = arith.addf %3, %5 : vector<128x8xf32>
    %cst = arith.constant 0.000000e+00 : f32
    %7 = vector.broadcast %cst : f32 to vector<128x8xf32>
    %8 = arith.maximumf %6, %7 : vector<128x8xf32>
    %c0_5 = arith.constant 0 : index
    %c0_6 = arith.constant 0 : index
    %9 = vector.load %arg4[%c0_5, %c0_6] : memref<128x8xf32, #tpu.memory_space<vmem>>, vector<128x8xf32>
    tpu.vector_store %arg4[%c0_5, %c0_6], %8 {strides = array<i32>} : memref<128x8xf32, #tpu.memory_space<vmem>>, vector<128x8xf32>,
    return
  }
  func.func @transform_0(%arg0: i32) -> (i32, i32) {
    %c0_i32 = arith.constant 0 : i32
    %c0_i32_0 = arith.constant 0 : i32
    return %arg0, %c0_i32 : i32, i32
  }
  func.func @transform_1(%arg0: i32) -> (i32, i32) {
    %c0_i32 = arith.constant 0 : i32
    %c0_i32_0 = arith.constant 0 : i32
    %c0_i32_1 = arith.constant 0 : i32
    return %c0_i32, %c0_i32_0 : i32, i32
  }
  func.func @transform_2(%arg0: i32) -> (i32, i32) {
    %c0_i32 = arith.constant 0 : i32
    %c0_i32_0 = arith.constant 0 : i32
    %c0_i32_1 = arith.constant 0 : i32
    return %c0_i32, %c0_i32_0 : i32, i32
  }
  func.func @transform_3(%arg0: i32) -> (i32, i32) {
    %c0_i32 = arith.constant 0 : i32
    %c0_i32_0 = arith.constant 0 : i32
    return %arg0, %c0_i32 : i32, i32
  }
}

</mosaic_0001>

<llo_original>
// kernel: down_forward.5
$region0: #{down_forward.5}
  #allocation0 [shape = 'u32[]', space=smem, size = 0x4, offset = 0x4, fixed_abs, tag = 'smem constant byte address 0x4 - core index']
  #allocation1 [shape = 'u32[144,128]{1,0:T(1,128)}', space=vmem, size = 0x12000, scoped, tag = 'internal scratch']
  %s0 = inlined_call_operand.vmem [shape: f32[128,8], index: 0, kind: input, shape index: {}]
  %s1 = inlined_call_operand.vmem [shape: f32[1,8], index: 1, kind: input, shape index: {}]
  %s2 = inlined_call_operand.vmem [shape: f32[1,8], index: 2, kind: input, shape index: {}]
  %s3 = inlined_call_operand.vmem [shape: bf16[128,8], index: 3, kind: output, shape index: {}]
  %s4 = sld [smem:[#allocation0]]
  $region22: #{down_forward.5} parent=0
    _
  %s6 = ssub.s32 1, %s4
  %s7 = scalar_select 0, %s6, %s4
  // Predicated region
  $region2: #{down_forward.5} parent=0 // pred_check
    _
  $region3: #{down_forward.5} parent=0 // pred_check_branch
    %9 = sbr.rel (0) target = $region5
  $region4: #{down_forward.5} parent=0 // pred_region
    _
  $region5: #{down_forward.5} parent=0 // pred_fallthru
    _
  // Predicated region
  $region6: #{down_forward.5} parent=0 // pred_check
    _
  $region7: #{down_forward.5} parent=0 // pred_check_branch
    %11 = sbr.rel (0) target = $region9
  $region8: #{down_forward.5} parent=0 // pred_region
    _
  $region9: #{down_forward.5} parent=0 // pred_fallthru
    _
  // Predicated region
  $region10: #{down_forward.5} parent=0 // pred_check
    _
  $region11: #{down_forward.5} parent=0 // pred_check_branch
    %13 = sbr.rel (0) target = $region13
  $region12: #{down_forward.5} parent=0 // pred_region
    _
  $region13: #{down_forward.5} parent=0 // pred_fallthru
    _
  %v14 = vld [vmem:[%s0] sm:$0xff]
  %v15 = vld [vmem:[%s0 + $0x8] sm:$0xff]
  %v16 = vld [vmem:[%s0 + $0x10] sm:$0xff]
  %v17 = vld [vmem:[%s0 + $0x18] sm:$0xff]
  %v18 = vld [vmem:[%s0 + $0x20] sm:$0xff]
  %v19 = vld [vmem:[%s0 + $0x28] sm:$0xff]
  %v20 = vld [vmem:[%s0 + $0x30] sm:$0xff]
  %v21 = vld [vmem:[%s0 + $0x38] sm:$0xff]
  %v22 = vld [vmem:[%s0 + $0x40] sm:$0xff]
  %v23 = vld [vmem:[%s0 + $0x48] sm:$0xff]
  %v24 = vld [vmem:[%s0 + $0x50] sm:$0xff]
  %v25 = vld [vmem:[%s0 + $0x58] sm:$0xff]
  %v26 = vld [vmem:[%s0 + $0x60] sm:$0xff]
  %v27 = vld [vmem:[%s0 + $0x68] sm:$0xff]
  %v28 = vld [vmem:[%s0 + $0x70] sm:$0xff]
  %v29 = vld [vmem:[%s0 + $0x78] sm:$0xff]
  %v30 = vld [vmem:[%s1] sm:$0x1]
  %v32 = vlaneseq
  %v33 = vshrl.u32 %v32, 7
  %v34 = vsub.s32 0, %v33
  %v35 = vrot.slane %v30, %v34
  %v37 = vmul.f32 %v14, %v35
  %v38 = vmul.f32 %v15, %v35
  %v39 = vmul.f32 %v16, %v35
  %v40 = vmul.f32 %v17, %v35
  %v41 = vmul.f32 %v18, %v35
  %v42 = vmul.f32 %v19, %v35
  %v43 = vmul.f32 %v20, %v35
  %v44 = vmul.f32 %v21, %v35
  %v45 = vmul.f32 %v22, %v35
  %v46 = vmul.f32 %v23, %v35
  %v47 = vmul.f32 %v24, %v35
  %v48 = vmul.f32 %v25, %v35
  %v49 = vmul.f32 %v26, %v35
  %v50 = vmul.f32 %v27, %v35
  %v51 = vmul.f32 %v28, %v35
  %v52 = vmul.f32 %v29, %v35
  %v53 = vld [vmem:[%s2] sm:$0x1]
  %v55 = vlaneseq
  %v56 = vshrl.u32 %v55, 7
  %v57 = vsub.s32 0, %v56
  %v58 = vrot.slane %v53, %v57
  %v60 = vadd.f32 %v37, %v58
  %v61 = vadd.f32 %v38, %v58
  %v62 = vadd.f32 %v39, %v58
  %v63 = vadd.f32 %v40, %v58
  %v64 = vadd.f32 %v41, %v58
  %v65 = vadd.f32 %v42, %v58
  %v66 = vadd.f32 %v43, %v58
  %v67 = vadd.f32 %v44, %v58
  %v68 = vadd.f32 %v45, %v58
  %v69 = vadd.f32 %v46, %v58
  %v70 = vadd.f32 %v47, %v58
  %v71 = vadd.f32 %v48, %v58
  %v72 = vadd.f32 %v49, %v58
  %v73 = vadd.f32 %v50, %v58
  %v74 = vadd.f32 %v51, %v58
  %v75 = vadd.f32 %v52, %v58
  %v76 = vmax.f32 %v60, 0.0
  %v77 = vmax.f32 %v61, 0.0
  %v78 = vmax.f32 %v62, 0.0
  %v79 = vmax.f32 %v63, 0.0
  %v80 = vmax.f32 %v64, 0.0
  %v81 = vmax.f32 %v65, 0.0
  %v82 = vmax.f32 %v66, 0.0
  %v83 = vmax.f32 %v67, 0.0
  %v84 = vmax.f32 %v68, 0.0
  %v85 = vmax.f32 %v69, 0.0
  %v86 = vmax.f32 %v70, 0.0
  %v87 = vmax.f32 %v71, 0.0
  %v88 = vmax.f32 %v72, 0.0
  %v89 = vmax.f32 %v73, 0.0
  %v90 = vmax.f32 %v74, 0.0
  %v91 = vmax.f32 %v75, 0.0
  %v92 = vpack.c.bf16 %v77, %v76
  %v93 = vpack.c.bf16 %v79, %v78
  %v94 = vpack.c.bf16 %v81, %v80
  %v95 = vpack.c.bf16 %v83, %v82
  %v96 = vpack.c.bf16 %v85, %v84
  %v97 = vpack.c.bf16 %v87, %v86
  %v98 = vpack.c.bf16 %v89, %v88
  %v99 = vpack.c.bf16 %v91, %v90
  %v108 = vunpack.c.l.b16 %v92
  %v109 = vunpack.c.h.b16 %v92
  %v110 = vunpack.c.l.b16 %v93
  %v111 = vunpack.c.h.b16 %v93
  %v112 = vunpack.c.l.b16 %v94
  %v113 = vunpack.c.h.b16 %v94
  %v114 = vunpack.c.l.b16 %v95
  %v115 = vunpack.c.h.b16 %v95
  %v116 = vunpack.c.l.b16 %v96
  %v117 = vunpack.c.h.b16 %v96
  %v118 = vunpack.c.l.b16 %v97
  %v119 = vunpack.c.h.b16 %v97
  %v120 = vunpack.c.l.b16 %v98
  %v121 = vunpack.c.h.b16 %v98
  %v122 = vunpack.c.l.b16 %v99
  %v123 = vunpack.c.h.b16 %v99
  %v124 = vpack.c.b16 %v108, %v108
  %v125 = vpack.c.b16 %v109, %v109
  %v126 = vpack.c.b16 %v110, %v110
  %v127 = vpack.c.b16 %v111, %v111
  %v128 = vpack.c.b16 %v112, %v112
  %v129 = vpack.c.b16 %v113, %v113
  %v130 = vpack.c.b16 %v114, %v114
  %v131 = vpack.c.b16 %v115, %v115
  %v132 = vpack.c.b16 %v116, %v116
  %v133 = vpack.c.b16 %v117, %v117
  %v134 = vpack.c.b16 %v118, %v118
  %v135 = vpack.c.b16 %v119, %v119
  %v136 = vpack.c.b16 %v120, %v120
  %v137 = vpack.c.b16 %v121, %v121
  %v138 = vpack.c.b16 %v122, %v122
  %v139 = vpack.c.b16 %v123, %v123
  %vm156 = vcmask 60416
  %157 = vst.msk [vmem:[%s3] sm:$0xf] %vm156, %v124
  %158 = vst.msk [vmem:[%s3 + $0x4] sm:$0xf] %vm156, %v125
  %159 = vst.msk [vmem:[%s3 + $0x8] sm:$0xf] %vm156, %v126
  %160 = vst.msk [vmem:[%s3 + $0xc] sm:$0xf] %vm156, %v127
  %161 = vst.msk [vmem:[%s3 + $0x10] sm:$0xf] %vm156, %v128
  %162 = vst.msk [vmem:[%s3 + $0x14] sm:$0xf] %vm156, %v129
  %163 = vst.msk [vmem:[%s3 + $0x18] sm:$0xf] %vm156, %v130
  %164 = vst.msk [vmem:[%s3 + $0x1c] sm:$0xf] %vm156, %v131
  %165 = vst.msk [vmem:[%s3 + $0x20] sm:$0xf] %vm156, %v132
  %166 = vst.msk [vmem:[%s3 + $0x24] sm:$0xf] %vm156, %v133
  %167 = vst.msk [vmem:[%s3 + $0x28] sm:$0xf] %vm156, %v134
  %168 = vst.msk [vmem:[%s3 + $0x2c] sm:$0xf] %vm156, %v135
  %169 = vst.msk [vmem:[%s3 + $0x30] sm:$0xf] %vm156, %v136
  %170 = vst.msk [vmem:[%s3 + $0x34] sm:$0xf] %vm156, %v137
  %171 = vst.msk [vmem:[%s3 + $0x38] sm:$0xf] %vm156, %v138
  %172 = vst.msk [vmem:[%s3 + $0x3c] sm:$0xf] %vm156, %v139
  // Predicated region
  $region14: #{down_forward.5} parent=0 // pred_check
    _
  $region15: #{down_forward.5} parent=0 // pred_check_branch
    %174 = sbr.rel (0) target = $region17
  $region16: #{down_forward.5} parent=0 // pred_region
    _
  $region17: #{down_forward.5} parent=0 // pred_fallthru
    _
  // Predicated region
  $region18: #{down_forward.5} parent=0 // pred_check
    _
  $region19: #{down_forward.5} parent=0 // pred_check_branch
    %176 = sbr.rel (0) target = $region21
  $region20: #{down_forward.5} parent=0 // pred_region
    _
  $region21: #{down_forward.5} parent=0 // pred_fallthru
    _

// kernel: down_forward.4
$region0: #{down_forward.4}
  #allocation0 [shape = 'u32[]', space=smem, size = 0x4, offset = 0x4, fixed_abs, tag = 'smem constant byte address 0x4 - core index']
  #allocation1 [shape = 'u32[144,128]{1,0:T(1,128)}', space=vmem, size = 0x12000, scoped, tag = 'internal scratch']
  #allocation2 [shape = 'f32[128,8]{1,0:T(8,128)}', space=vmem, size = 0x10000, scoped, tag = 'scratch operand']
  %s0 = inlined_call_operand.vmem [shape: bf16[128,36], index: 0, kind: input, shape index: {}]
  %s1 = inlined_call_operand.vmem [shape: bf16[36,8], index: 1, kind: input, shape index: {}]
  %s2 = inlined_call_operand.vmem [shape: f32[128,8], index: 2, kind: output, shape index: {0}]
  %s3 = inlined_call_operand.vmem [shape: f32[1,8], index: 3, kind: output, shape index: {1}]
  %s4 = inlined_call_operand.vmem [shape: f32[1,8], index: 4, kind: output, shape index: {2}]
  %5 = xla_tuple %s2, %s3, %s4
  %s6 = sld [smem:[#allocation0]]
  $region46: #{down_forward.4} parent=0
    _
  %s8 = ssub.s32 1, %s6
  %s9 = scalar_select 0, %s8, %s6
  // Predicated region
  $region2: #{down_forward.4} parent=0 // pred_check
    _
  $region3: #{down_forward.4} parent=0 // pred_check_branch
    %11 = sbr.rel (0) target = $region5
  $region4: #{down_forward.4} parent=0 // pred_region
    _
  $region5: #{down_forward.4} parent=0 // pred_fallthru
    _
  // Predicated region
  $region6: #{down_forward.4} parent=0 // pred_check
    _
  $region7: #{down_forward.4} parent=0 // pred_check_branch
    %13 = sbr.rel (0) target = $region9
  $region8: #{down_forward.4} parent=0 // pred_region
    _
  $region9: #{down_forward.4} parent=0 // pred_fallthru
    _
  %p15 = scmp.eq.s32.totalorder 0, 0
  %p16 = scmp.eq.s32.totalorder 0, 0
  %p17 = pnand %p15, %p16
  %p18 = pneg %p17
  // Predicated region
  $region10: #{down_forward.4} parent=0 // pred_check
    _
  $region11: #{down_forward.4} parent=0 // pred_check_branch
    %20 = sbr.rel (%p17) target = $region13
  $region12: #{down_forward.4} parent=0 // pred_region
    %vm21 = vcmask 57344
    %22 = vst.msk [vmem:[%s3] sm:$0x1] %vm21, 0.0
    %23 = vst.msk [vmem:[%s4] sm:$0x1] %vm21, 0.0
  $region13: #{down_forward.4} parent=0 // pred_fallthru
    _
  // Predicated region
  $region14: #{down_forward.4} parent=0 // pred_check
    %p24 = pneg %p16
  $region15: #{down_forward.4} parent=0 // pred_check_branch
    %26 = sbr.rel (%p24) target = $region17
  $region16: #{down_forward.4} parent=0 // pred_region
    %vm27 = vcmask 64512
    %28 = vst.msk [vmem:[#allocation2] sm:$0xff] %vm27, 0.0
    %29 = vst.msk [vmem:[#allocation2 + $0x8] sm:$0xff] %vm27, 0.0
    %30 = vst.msk [vmem:[#allocation2 + $0x10] sm:$0xff] %vm27, 0.0
    %31 = vst.msk [vmem:[#allocation2 + $0x18] sm:$0xff] %vm27, 0.0
    %32 = vst.msk [vmem:[#allocation2 + $0x20] sm:$0xff] %vm27, 0.0
    %33 = vst.msk [vmem:[#allocation2 + $0x28] sm:$0xff] %vm27, 0.0
    %34 = vst.msk [vmem:[#allocation2 + $0x30] sm:$0xff] %vm27, 0.0
    %35 = vst.msk [vmem:[#allocation2 + $0x38] sm:$0xff] %vm27, 0.0
    %36 = vst.msk [vmem:[#allocation2 + $0x40] sm:$0xff] %vm27, 0.0
    %37 = vst.msk [vmem:[#allocation2 + $0x48] sm:$0xff] %vm27, 0.0
    %38 = vst.msk [vmem:[#allocation2 + $0x50] sm:$0xff] %vm27, 0.0
    %39 = vst.msk [vmem:[#allocation2 + $0x58] sm:$0xff] %vm27, 0.0
    %40 = vst.msk [vmem:[#allocation2 + $0x60] sm:$0xff] %vm27, 0.0
    %41 = vst.msk [vmem:[#allocation2 + $0x68] sm:$0xff] %vm27, 0.0
    %42 = vst.msk [vmem:[#allocation2 + $0x70] sm:$0xff] %vm27, 0.0
    %43 = vst.msk [vmem:[#allocation2 + $0x78] sm:$0xff] %vm27, 0.0
  $region17: #{down_forward.4} parent=0 // pred_fallthru
    _
  %v44 = vld [vmem:[#allocation2] sm:$0xff]
  %v45 = vld [vmem:[#allocation2 + $0x8] sm:$0xff]
  %v46 = vld [vmem:[#allocation2 + $0x10] sm:$0xff]
  %v47 = vld [vmem:[#allocation2 + $0x18] sm:$0xff]
  %v48 = vld [vmem:[#allocation2 + $0x20] sm:$0xff]
  %v49 = vld [vmem:[#allocation2 + $0x28] sm:$0xff]
  %v50 = vld [vmem:[#allocation2 + $0x30] sm:$0xff]
  %v51 = vld [vmem:[#allocation2 + $0x38] sm:$0xff]
  %v52 = vld [vmem:[#allocation2 + $0x40] sm:$0xff]
  %v53 = vld [vmem:[#allocation2 + $0x48] sm:$0xff]
  %v54 = vld [vmem:[#allocation2 + $0x50] sm:$0xff]
  %v55 = vld [vmem:[#allocation2 + $0x58] sm:$0xff]
  %v56 = vld [vmem:[#allocation2 + $0x60] sm:$0xff]
  %v57 = vld [vmem:[#allocation2 + $0x68] sm:$0xff]
  %v58 = vld [vmem:[#allocation2 + $0x70] sm:$0xff]
  %v59 = vld [vmem:[#allocation2 + $0x78] sm:$0xff]
  %v60 = vld [vmem:[%s0] sm:$0xf]
  %v61 = vld [vmem:[%s0 + $0x4] sm:$0xf]
  %v62 = vld [vmem:[%s0 + $0x8] sm:$0xf]
  %v63 = vld [vmem:[%s0 + $0xc] sm:$0xf]
  %v64 = vld [vmem:[%s0 + $0x10] sm:$0xf]
  %v65 = vld [vmem:[%s0 + $0x14] sm:$0xf]
  %v66 = vld [vmem:[%s0 + $0x18] sm:$0xf]
  %v67 = vld [vmem:[%s0 + $0x1c] sm:$0xf]
  %v68 = vld [vmem:[%s0 + $0x20] sm:$0xf]
  %v69 = vld [vmem:[%s0 + $0x24] sm:$0xf]
  %v70 = vld [vmem:[%s0 + $0x28] sm:$0xf]
  %v71 = vld [vmem:[%s0 + $0x2c] sm:$0xf]
  %v72 = vld [vmem:[%s0 + $0x30] sm:$0xf]
  %v73 = vld [vmem:[%s0 + $0x34] sm:$0xf]
  %v74 = vld [vmem:[%s0 + $0x38] sm:$0xf]
  %v75 = vld [vmem:[%s0 + $0x3c] sm:$0xf]
  %v76 = vld [vmem:[%s1] sm:$0xf]
  %v77 = vld [vmem:[%s1 + $0x4] sm:$0xf]
  %v78 = vld [vmem:[%s1 + $0x8] sm:$0xf]
  %v79 = vld [vmem:[%s1 + $0xc] sm:$0xf]
  %v80 = vld [vmem:[%s1 + $0x10] sm:$0x3]
  %v97 = vunpack.c.l.b16 %v60
  %v98 = vunpack.c.l.b16 %v61
  %v99 = vunpack.c.l.b16 %v62
  %v100 = vunpack.c.l.b16 %v63
  %v101 = vunpack.c.l.b16 %v64
  %v102 = vunpack.c.l.b16 %v65
  %v103 = vunpack.c.l.b16 %v66
  %v104 = vunpack.c.l.b16 %v67
  %v105 = vunpack.c.l.b16 %v68
  %v106 = vunpack.c.l.b16 %v69
  %v107 = vunpack.c.l.b16 %v70
  %v108 = vunpack.c.l.b16 %v71
  %v109 = vunpack.c.l.b16 %v72
  %v110 = vunpack.c.l.b16 %v73
  %v111 = vunpack.c.l.b16 %v74
  %v112 = vunpack.c.l.b16 %v75
  %v113 = vpack.c.b16 %v98, %v97
  %v114 = vpack.c.b16 %v100, %v99
  %v115 = vpack.c.b16 %v102, %v101
  %v116 = vpack.c.b16 %v104, %v103
  %v117 = vpack.c.b16 %v106, %v105
  %v118 = vpack.c.b16 %v108, %v107
  %v119 = vpack.c.b16 %v110, %v109
  %v120 = vpack.c.b16 %v112, %v111
  %v126 = vunpack.c.l.b16 %v76
  %v127 = vunpack.c.l.b16 %v77
  %v128 = vunpack.c.l.b16 %v78
  %v129 = vunpack.c.l.b16 %v79
  %v130 = vunpack.c.l.b16 %v80
  %v131 = vpack.c.b16 %v127, %v126
  %v132 = vpack.c.b16 %v129, %v128
  %v133 = vpack.c.b16 %v130, %v130
  %vm136 = vcmask 293888
  %v138 = vsel %vm136, %v113, 0
  %v141 = vsel %vm136, %v114, 0
  %v144 = vsel %vm136, %v115, 0
  %v147 = vsel %vm136, %v116, 0
  %v150 = vsel %vm136, %v117, 0
  %v153 = vsel %vm136, %v118, 0
  %v156 = vsel %vm136, %v119, 0
  %v159 = vsel %vm136, %v120, 0
  %vm161 = vcmask 1041408
  %v163 = vsel %vm161, %v133, 0
  %165 = vmatprep.subr.bf16.mxu0 0
  %166 = vmatpush1.bf16.msra.mxu0 %v131
  %167 = vmatprep.subr.bf16.mxu0 0
  %168 = vmatpush1.bf16.msra.mxu0 %v132
  %169 = vmatprep.subr.bf16.mxu0 0
  %170 = vmatpush1.bf16.msra.mxu0 %v163
  %171 = vmatprep.subr.bf16.mxu0 0
  %172 = vmatpush1.bf16.msra.mxu0 0
  %173 = vmatprep.subr.bf16.mxu0 0
  %174 = vmatpush1.bf16.msra.mxu0 0
  %175 = vmatprep.subr.bf16.mxu0 0
  %176 = vmatpush1.bf16.msra.mxu0 0
  %177 = vmatprep.subr.bf16.mxu0 0
  %178 = vmatpush1.bf16.msra.mxu0 0
  %179 = vmatprep.subr.bf16.mxu0 0
  %180 = vmatpush1.bf16.msra.mxu0 0
  %181 = vmatprep.subr.bf16.mxu0 0
  %182 = vmatpush1.bf16.msra.mxu0 0
  %183 = vmatprep.subr.bf16.mxu0 0
  %184 = vmatpush1.bf16.msra.mxu0 0
  %185 = vmatprep.subr.bf16.mxu0 0
  %186 = vmatpush1.bf16.msra.mxu0 0
  %187 = vmatprep.subr.bf16.mxu0 0
  %188 = vmatpush1.bf16.msra.mxu0 0
  %189 = vmatprep.subr.bf16.mxu0 0
  %190 = vmatpush1.bf16.msra.mxu0 0
  %191 = vmatprep.subr.bf16.mxu0 0
  %192 = vmatpush1.bf16.msra.mxu0 0
  %193 = vmatprep.subr.bf16.mxu0 0
  %194 = vmatpush1.bf16.msra.mxu0 0
  %195 = vmatprep.subr.bf16.mxu0 0
  %196 = vmatpush1.bf16.msra.mxu0 0
  %197 = vmatprep.mubr.bf16.mxu0 0
  %198 = vmatmul.mubr.bf16.gmra.mrb[0].mxu0 %v138
  %v199 = vpop.f32.mrb[0].mxu0
  %v200 = vadd.f32 0.0, %v199
  %v201 = vpop.f32.mrb[0].mxu0
  %v202 = vpop.f32.mrb[0].mxu0
  %v203 = vadd.f32 0.0, %v202
  %v204 = vpop.f32.mrb[0].mxu0
  %205 = vmatprep.mubr.bf16.mxu0 0
  %206 = vmatmul.mubr.bf16.gmra.mrb[0].mxu0 %v141
  %v207 = vpop.f32.mrb[0].mxu0
  %v208 = vadd.f32 0.0, %v207
  %v209 = vpop.f32.mrb[0].mxu0
  %v210 = vpop.f32.mrb[0].mxu0
  %v211 = vadd.f32 0.0, %v210
  %v212 = vpop.f32.mrb[0].mxu0
  %213 = vmatprep.mubr.bf16.mxu0 0
  %214 = vmatmul.mubr.bf16.gmra.mrb[0].mxu0 %v144
  %v215 = vpop.f32.mrb[0].mxu0
  %v216 = vadd.f32 0.0, %v215
  %v217 = vpop.f32.mrb[0].mxu0
  %v218 = vpop.f32.mrb[0].mxu0
  %v219 = vadd.f32 0.0, %v218
  %v220 = vpop.f32.mrb[0].mxu0
  %221 = vmatprep.mubr.bf16.mxu0 0
  %222 = vmatmul.mubr.bf16.gmra.mrb[0].mxu0 %v147
  %v223 = vpop.f32.mrb[0].mxu0
  %v224 = vadd.f32 0.0, %v223
  %v225 = vpop.f32.mrb[0].mxu0
  %v226 = vpop.f32.mrb[0].mxu0
  %v227 = vadd.f32 0.0, %v226
  %v228 = vpop.f32.mrb[0].mxu0
  %229 = vmatprep.mubr.bf16.mxu0 0
  %230 = vmatmul.mubr.bf16.gmra.mrb[0].mxu0 %v150
  %v231 = vpop.f32.mrb[0].mxu0
  %v232 = vadd.f32 0.0, %v231
  %v233 = vpop.f32.mrb[0].mxu0
  %v234 = vpop.f32.mrb[0].mxu0
  %v235 = vadd.f32 0.0, %v234
  %v236 = vpop.f32.mrb[0].mxu0
  %237 = vmatprep.mubr.bf16.mxu0 0
  %238 = vmatmul.mubr.bf16.gmra.mrb[0].mxu0 %v153
  %v239 = vpop.f32.mrb[0].mxu0
  %v240 = vadd.f32 0.0, %v239
  %v241 = vpop.f32.mrb[0].mxu0
  %v242 = vpop.f32.mrb[0].mxu0
  %v243 = vadd.f32 0.0, %v242
  %v244 = vpop.f32.mrb[0].mxu0
  %245 = vmatprep.mubr.bf16.mxu0 0
  %246 = vmatmul.mubr.bf16.gmra.mrb[0].mxu0 %v156
  %v247 = vpop.f32.mrb[0].mxu0
  %v248 = vadd.f32 0.0, %v247
  %v249 = vpop.f32.mrb[0].mxu0
  %v250 = vpop.f32.mrb[0].mxu0
  %v251 = vadd.f32 0.0, %v250
  %v252 = vpop.f32.mrb[0].mxu0
  %253 = vmatprep.mubr.bf16.mxu0 0
  %254 = vmatmul.mubr.bf16.gmra.mrb[0].mxu0 %v159
  %v255 = vpop.f32.mrb[0].mxu0
  %v256 = vadd.f32 0.0, %v255
  %v257 = vpop.f32.mrb[0].mxu0
  %v258 = vpop.f32.mrb[0].mxu0
  %v259 = vadd.f32 0.0, %v258
  %v260 = vpop.f32.mrb[0].mxu0
  %261 = vdwg.mxu0
  %v262 = vadd.f32 %v44, %v200
  %v263 = vadd.f32 %v45, %v203
  %v264 = vadd.f32 %v46, %v208
  %v265 = vadd.f32 %v47, %v211
  %v266 = vadd.f32 %v48, %v216
  %v267 = vadd.f32 %v49, %v219
  %v268 = vadd.f32 %v50, %v224
  %v269 = vadd.f32 %v51, %v227
  %v270 = vadd.f32 %v52, %v232
  %v271 = vadd.f32 %v53, %v235
  %v272 = vadd.f32 %v54, %v240
  %v273 = vadd.f32 %v55, %v243
  %v274 = vadd.f32 %v56, %v248
  %v275 = vadd.f32 %v57, %v251
  %v276 = vadd.f32 %v58, %v256
  %v277 = vadd.f32 %v59, %v259
  %vm278 = vcmask 64512
  %279 = vst.msk [vmem:[#allocation2] sm:$0xff] %vm278, %v262
  %280 = vst.msk [vmem:[#allocation2 + $0x8] sm:$0xff] %vm278, %v263
  %281 = vst.msk [vmem:[#allocation2 + $0x10] sm:$0xff] %vm278, %v264
  %282 = vst.msk [vmem:[#allocation2 + $0x18] sm:$0xff] %vm278, %v265
  %283 = vst.msk [vmem:[#allocation2 + $0x20] sm:$0xff] %vm278, %v266
  %284 = vst.msk [vmem:[#allocation2 + $0x28] sm:$0xff] %vm278, %v267
  %285 = vst.msk [vmem:[#allocation2 + $0x30] sm:$0xff] %vm278, %v268
  %286 = vst.msk [vmem:[#allocation2 + $0x38] sm:$0xff] %vm278, %v269
  %287 = vst.msk [vmem:[#allocation2 + $0x40] sm:$0xff] %vm278, %v270
  %288 = vst.msk [vmem:[#allocation2 + $0x48] sm:$0xff] %vm278, %v271
  %289 = vst.msk [vmem:[#allocation2 + $0x50] sm:$0xff] %vm278, %v272
  %290 = vst.msk [vmem:[#allocation2 + $0x58] sm:$0xff] %vm278, %v273
  %291 = vst.msk [vmem:[#allocation2 + $0x60] sm:$0xff] %vm278, %v274
  %292 = vst.msk [vmem:[#allocation2 + $0x68] sm:$0xff] %vm278, %v275
  %293 = vst.msk [vmem:[#allocation2 + $0x70] sm:$0xff] %vm278, %v276
  %294 = vst.msk [vmem:[#allocation2 + $0x78] sm:$0xff] %vm278, %v277
  // Predicated region
  $region18: #{down_forward.4} parent=0 // pred_check
    %p295 = pneg %p16
  $region19: #{down_forward.4} parent=0 // pred_check_branch
    %297 = sbr.rel (%p295) target = $region21
  $region20: #{down_forward.4} parent=0 // pred_region
    %v298 = vld [vmem:[#allocation2] sm:$0xff]
    %v299 = vld [vmem:[#allocation2 + $0x8] sm:$0xff]
    %v300 = vld [vmem:[#allocation2 + $0x10] sm:$0xff]
    %v301 = vld [vmem:[#allocation2 + $0x18] sm:$0xff]
    %v302 = vld [vmem:[#allocation2 + $0x20] sm:$0xff]
    %v303 = vld [vmem:[#allocation2 + $0x28] sm:$0xff]
    %v304 = vld [vmem:[#allocation2 + $0x30] sm:$0xff]
    %v305 = vld [vmem:[#allocation2 + $0x38] sm:$0xff]
    %v306 = vld [vmem:[#allocation2 + $0x40] sm:$0xff]
    %v307 = vld [vmem:[#allocation2 + $0x48] sm:$0xff]
    %v308 = vld [vmem:[#allocation2 + $0x50] sm:$0xff]
    %v309 = vld [vmem:[#allocation2 + $0x58] sm:$0xff]
    %v310 = vld [vmem:[#allocation2 + $0x60] sm:$0xff]
    %v311 = vld [vmem:[#allocation2 + $0x68] sm:$0xff]
    %v312 = vld [vmem:[#allocation2 + $0x70] sm:$0xff]
    %v313 = vld [vmem:[#allocation2 + $0x78] sm:$0xff]
    %314 = vst.msk [vmem:[%s2] sm:$0xff] %vm278, %v298
    %315 = vst.msk [vmem:[%s2 + $0x8] sm:$0xff] %vm278, %v299
    %316 = vst.msk [vmem:[%s2 + $0x10] sm:$0xff] %vm278, %v300
    %317 = vst.msk [vmem:[%s2 + $0x18] sm:$0xff] %vm278, %v301
    %318 = vst.msk [vmem:[%s2 + $0x20] sm:$0xff] %vm278, %v302
    %319 = vst.msk [vmem:[%s2 + $0x28] sm:$0xff] %vm278, %v303
    %320 = vst.msk [vmem:[%s2 + $0x30] sm:$0xff] %vm278, %v304
    %321 = vst.msk [vmem:[%s2 + $0x38] sm:$0xff] %vm278, %v305
    %322 = vst.msk [vmem:[%s2 + $0x40] sm:$0xff] %vm278, %v306
    %323 = vst.msk [vmem:[%s2 + $0x48] sm:$0xff] %vm278, %v307
    %324 = vst.msk [vmem:[%s2 + $0x50] sm:$0xff] %vm278, %v308
    %325 = vst.msk [vmem:[%s2 + $0x58] sm:$0xff] %vm278, %v309
    %326 = vst.msk [vmem:[%s2 + $0x60] sm:$0xff] %vm278, %v310
    %327 = vst.msk [vmem:[%s2 + $0x68] sm:$0xff] %vm278, %v311
    %328 = vst.msk [vmem:[%s2 + $0x70] sm:$0xff] %vm278, %v312
    %329 = vst.msk [vmem:[%s2 + $0x78] sm:$0xff] %vm278, %v313
    %v330 = vld [vmem:[%s3] sm:$0x1]
    %v331 = vsel %vm278, %v298, 0.0
    %v332 = vsel %vm278, %v299, 0.0
    %v333 = vadd.f32 %v331, %v332
    %v334 = vsel %vm278, %v300, 0.0
    %v335 = vadd.f32 %v333, %v334
    %v336 = vsel %vm278, %v301, 0.0
    %v337 = vadd.f32 %v335, %v336
    %v338 = vsel %vm278, %v302, 0.0
    %v339 = vadd.f32 %v337, %v338
    %v340 = vsel %vm278, %v303, 0.0
    %v341 = vadd.f32 %v339, %v340
    %v342 = vsel %vm278, %v304, 0.0
    %v343 = vadd.f32 %v341, %v342
    %v344 = vsel %vm278, %v305, 0.0
    %v345 = vadd.f32 %v343, %v344
    %v346 = vsel %vm278, %v306, 0.0
    %v347 = vadd.f32 %v345, %v346
    %v348 = vsel %vm278, %v307, 0.0
    %v349 = vadd.f32 %v347, %v348
    %v350 = vsel %vm278, %v308, 0.0
    %v351 = vadd.f32 %v349, %v350
    %v352 = vsel %vm278, %v309, 0.0
    %v353 = vadd.f32 %v351, %v352
    %v354 = vsel %vm278, %v310, 0.0
    %v355 = vadd.f32 %v353, %v354
    %v356 = vsel %vm278, %v311, 0.0
    %v357 = vadd.f32 %v355, %v356
    %v358 = vsel %vm278, %v312, 0.0
    %v359 = vadd.f32 %v357, %v358
    %v360 = vsel %vm278, %v313, 0.0
    %v361 = vadd.f32 %v359, %v360
    %v362 = vrot.slane %v361, 4
    %v363 = vadd.f32 %v361, %v362
    %v364 = vrot.slane %v363, 2
    %v365 = vadd.f32 %v363, %v364
    %v366 = vrot.slane %v365, 1
    %v367 = vadd.f32 %v365, %v366
    %v368 = vadd.f32 %v330, %v367
    %vm369 = vcmask 57344
    %370 = vst.msk [vmem:[%s3] sm:$0x1] %vm369, %v368
    %v371 = vld [vmem:[%s4] sm:$0x1]
    %v372 = vmul.f32 %v298, %v298
    %v373 = vmul.f32 %v299, %v299
    %v374 = vmul.f32 %v300, %v300
    %v375 = vmul.f32 %v301, %v301
    %v376 = vmul.f32 %v302, %v302
    %v377 = vmul.f32 %v303, %v303
    %v378 = vmul.f32 %v304, %v304
    %v379 = vmul.f32 %v305, %v305
    %v380 = vmul.f32 %v306, %v306
    %v381 = vmul.f32 %v307, %v307
    %v382 = vmul.f32 %v308, %v308
    %v383 = vmul.f32 %v309, %v309
    %v384 = vmul.f32 %v310, %v310
    %v385 = vmul.f32 %v311, %v311
    %v386 = vmul.f32 %v312, %v312
    %v387 = vmul.f32 %v313, %v313
    %v388 = vsel %vm278, %v372, 0.0
    %v389 = vsel %vm278, %v373, 0.0
    %v390 = vadd.f32 %v388, %v389
    %v391 = vsel %vm278, %v374, 0.0
    %v392 = vadd.f32 %v390, %v391
    %v393 = vsel %vm278, %v375, 0.0
    %v394 = vadd.f32 %v392, %v393
    %v395 = vsel %vm278, %v376, 0.0
    %v396 = vadd.f32 %v394, %v395
    %v397 = vsel %vm278, %v377, 0.0
    %v398 = vadd.f32 %v396, %v397
    %v399 = vsel %vm278, %v378, 0.0
    %v400 = vadd.f32 %v398, %v399
    %v401 = vsel %vm278, %v379, 0.0
    %v402 = vadd.f32 %v400, %v401
    %v403 = vsel %vm278, %v380, 0.0
    %v404 = vadd.f32 %v402, %v403
    %v405 = vsel %vm278, %v381, 0.0
    %v406 = vadd.f32 %v404, %v405
    %v407 = vsel %vm278, %v382, 0.0
    %v408 = vadd.f32 %v406, %v407
    %v409 = vsel %vm278, %v383, 0.0
    %v410 = vadd.f32 %v408, %v409
    %v411 = vsel %vm278, %v384, 0.0
    %v412 = vadd.f32 %v410, %v411
    %v413 = vsel %vm278, %v385, 0.0
    %v414 = vadd.f32 %v412, %v413
    %v415 = vsel %vm278, %v386, 0.0
    %v416 = vadd.f32 %v414, %v415
    %v417 = vsel %vm278, %v387, 0.0
    %v418 = vadd.f32 %v416, %v417
    %v419 = vrot.slane %v418, 4
    %v420 = vadd.f32 %v418, %v419
    %v421 = vrot.slane %v420, 2
    %v422 = vadd.f32 %v420, %v421
    %v423 = vrot.slane %v422, 1
    %v424 = vadd.f32 %v422, %v423
    %v425 = vadd.f32 %v371, %v424
    %426 = vst.msk [vmem:[%s4] sm:$0x1] %vm369, %v425
  $region21: #{down_forward.4} parent=0 // pred_fallthru
    _
  // Predicated region
  $region22: #{down_forward.4} parent=0 // pred_check
    _
  $region23: #{down_forward.4} parent=0 // pred_check_branch
    %428 = sbr.rel (0) target = $region25
  $region24: #{down_forward.4} parent=0 // pred_region
    _
  $region25: #{down_forward.4} parent=0 // pred_fallthru
    _
  // Predicated region
  $region26: #{down_forward.4} parent=0 // pred_check
    _
  $region27: #{down_forward.4} parent=0 // pred_check_branch
    %430 = sbr.rel (0) target = $region29
  $region28: #{down_forward.4} parent=0 // pred_region
    _
  $region29: #{down_forward.4} parent=0 // pred_fallthru
    _
  // Predicated region
  $region30: #{down_forward.4} parent=0 // pred_check
    _
  $region31: #{down_forward.4} parent=0 // pred_check_branch
    %432 = sbr.rel (0) target = $region33
  $region32: #{down_forward.4} parent=0 // pred_region
    _
  $region33: #{down_forward.4} parent=0 // pred_fallthru
    _
  // Predicated region
  $region34: #{down_forward.4} parent=0 // pred_check
    _
  $region35: #{down_forward.4} parent=0 // pred_check_branch
    %434 = sbr.rel (0) target = $region37
  $region36: #{down_forward.4} parent=0 // pred_region
    _
  $region37: #{down_forward.4} parent=0 // pred_fallthru
    _
  // Predicated region
  $region38: #{down_forward.4} parent=0 // pred_check
    _
  $region39: #{down_forward.4} parent=0 // pred_check_branch
    %436 = sbr.rel (0) target = $region41
  $region40: #{down_forward.4} parent=0 // pred_region
    _
  $region41: #{down_forward.4} parent=0 // pred_fallthru
    _
  // Predicated region
  $region42: #{down_forward.4} parent=0 // pred_check
    _
  $region43: #{down_forward.4} parent=0 // pred_check_branch
    %438 = sbr.rel (0) target = $region45
  $region44: #{down_forward.4} parent=0 // pred_region
    _
  $region45: #{down_forward.4} parent=0 // pred_fallthru
    _

// kernel: down_forward.7
$region0: #{down_forward.7}
  #allocation0 [shape = 'u32[]', space=smem, size = 0x4, offset = 0x4, fixed_abs, tag = 'smem constant byte address 0x4 - core index']
  #allocation1 [shape = 'u32[144,128]{1,0:T(1,128)}', space=vmem, size = 0x12000, scoped, tag = 'internal scratch']
  %s0 = inlined_call_operand.vmem [shape: f32[128,8], index: 0, kind: input, shape index: {}]
  %s1 = inlined_call_operand.vmem [shape: f32[1,8], index: 1, kind: input, shape index: {}]
  %s2 = inlined_call_operand.vmem [shape: f32[1,8], index: 2, kind: input, shape index: {}]
  %s3 = inlined_call_operand.vmem [shape: f32[128,8], index: 3, kind: output, shape index: {}]
  %s4 = sld [smem:[#allocation0]]
  $region22: #{down_forward.7} parent=0
    _
  %s6 = ssub.s32 1, %s4
  %s7 = scalar_select 0, %s6, %s4
  // Predicated region
  $region2: #{down_forward.7} parent=0 // pred_check
    _
  $region3: #{down_forward.7} parent=0 // pred_check_branch
    %9 = sbr.rel (0) target = $region5
  $region4: #{down_forward.7} parent=0 // pred_region
    _
  $region5: #{down_forward.7} parent=0 // pred_fallthru
    _
  // Predicated region
  $region6: #{down_forward.7} parent=0 // pred_check
    _
  $region7: #{down_forward.7} parent=0 // pred_check_branch
    %11 = sbr.rel (0) target = $region9
  $region8: #{down_forward.7} parent=0 // pred_region
    _
  $region9: #{down_forward.7} parent=0 // pred_fallthru
    _
  // Predicated region
  $region10: #{down_forward.7} parent=0 // pred_check
    _
  $region11: #{down_forward.7} parent=0 // pred_check_branch
    %13 = sbr.rel (0) target = $region13
  $region12: #{down_forward.7} parent=0 // pred_region
    _
  $region13: #{down_forward.7} parent=0 // pred_fallthru
    _
  %v14 = vld [vmem:[%s0] sm:$0xff]
  %v15 = vld [vmem:[%s0 + $0x8] sm:$0xff]
  %v16 = vld [vmem:[%s0 + $0x10] sm:$0xff]
  %v17 = vld [vmem:[%s0 + $0x18] sm:$0xff]
  %v18 = vld [vmem:[%s0 + $0x20] sm:$0xff]
  %v19 = vld [vmem:[%s0 + $0x28] sm:$0xff]
  %v20 = vld [vmem:[%s0 + $0x30] sm:$0xff]
  %v21 = vld [vmem:[%s0 + $0x38] sm:$0xff]
  %v22 = vld [vmem:[%s0 + $0x40] sm:$0xff]
  %v23 = vld [vmem:[%s0 + $0x48] sm:$0xff]
  %v24 = vld [vmem:[%s0 + $0x50] sm:$0xff]
  %v25 = vld [vmem:[%s0 + $0x58] sm:$0xff]
  %v26 = vld [vmem:[%s0 + $0x60] sm:$0xff]
  %v27 = vld [vmem:[%s0 + $0x68] sm:$0xff]
  %v28 = vld [vmem:[%s0 + $0x70] sm:$0xff]
  %v29 = vld [vmem:[%s0 + $0x78] sm:$0xff]
  %v30 = vld [vmem:[%s1] sm:$0x1]
  %v32 = vlaneseq
  %v33 = vshrl.u32 %v32, 7
  %v34 = vsub.s32 0, %v33
  %v35 = vrot.slane %v30, %v34
  %v37 = vmul.f32 %v14, %v35
  %v38 = vmul.f32 %v15, %v35
  %v39 = vmul.f32 %v16, %v35
  %v40 = vmul.f32 %v17, %v35
  %v41 = vmul.f32 %v18, %v35
  %v42 = vmul.f32 %v19, %v35
  %v43 = vmul.f32 %v20, %v35
  %v44 = vmul.f32 %v21, %v35
  %v45 = vmul.f32 %v22, %v35
  %v46 = vmul.f32 %v23, %v35
  %v47 = vmul.f32 %v24, %v35
  %v48 = vmul.f32 %v25, %v35
  %v49 = vmul.f32 %v26, %v35
  %v50 = vmul.f32 %v27, %v35
  %v51 = vmul.f32 %v28, %v35
  %v52 = vmul.f32 %v29, %v35
  %v53 = vld [vmem:[%s2] sm:$0x1]
  %v55 = vlaneseq
  %v56 = vshrl.u32 %v55, 7
  %v57 = vsub.s32 0, %v56
  %v58 = vrot.slane %v53, %v57
  %v60 = vadd.f32 %v37, %v58
  %v61 = vadd.f32 %v38, %v58
  %v62 = vadd.f32 %v39, %v58
  %v63 = vadd.f32 %v40, %v58
  %v64 = vadd.f32 %v41, %v58
  %v65 = vadd.f32 %v42, %v58
  %v66 = vadd.f32 %v43, %v58
  %v67 = vadd.f32 %v44, %v58
  %v68 = vadd.f32 %v45, %v58
  %v69 = vadd.f32 %v46, %v58
  %v70 = vadd.f32 %v47, %v58
  %v71 = vadd.f32 %v48, %v58
  %v72 = vadd.f32 %v49, %v58
  %v73 = vadd.f32 %v50, %v58
  %v74 = vadd.f32 %v51, %v58
  %v75 = vadd.f32 %v52, %v58
  %v76 = vmax.f32 %v60, 0.0
  %v77 = vmax.f32 %v61, 0.0
  %v78 = vmax.f32 %v62, 0.0
  %v79 = vmax.f32 %v63, 0.0
  %v80 = vmax.f32 %v64, 0.0
  %v81 = vmax.f32 %v65, 0.0
  %v82 = vmax.f32 %v66, 0.0
  %v83 = vmax.f32 %v67, 0.0
  %v84 = vmax.f32 %v68, 0.0
  %v85 = vmax.f32 %v69, 0.0
  %v86 = vmax.f32 %v70, 0.0
  %v87 = vmax.f32 %v71, 0.0
  %v88 = vmax.f32 %v72, 0.0
  %v89 = vmax.f32 %v73, 0.0
  %v90 = vmax.f32 %v74, 0.0
  %v91 = vmax.f32 %v75, 0.0
  %vm92 = vcmask 64512
  %93 = vst.msk [vmem:[%s3] sm:$0xff] %vm92, %v76
  %94 = vst.msk [vmem:[%s3 + $0x8] sm:$0xff] %vm92, %v77
  %95 = vst.msk [vmem:[%s3 + $0x10] sm:$0xff] %vm92, %v78
  %96 = vst.msk [vmem:[%s3 + $0x18] sm:$0xff] %vm92, %v79
  %97 = vst.msk [vmem:[%s3 + $0x20] sm:$0xff] %vm92, %v80
  %98 = vst.msk [vmem:[%s3 + $0x28] sm:$0xff] %vm92, %v81
  %99 = vst.msk [vmem:[%s3 + $0x30] sm:$0xff] %vm92, %v82
  %100 = vst.msk [vmem:[%s3 + $0x38] sm:$0xff] %vm92, %v83
  %101 = vst.msk [vmem:[%s3 + $0x40] sm:$0xff] %vm92, %v84
  %102 = vst.msk [vmem:[%s3 + $0x48] sm:$0xff] %vm92, %v85
  %103 = vst.msk [vmem:[%s3 + $0x50] sm:$0xff] %vm92, %v86
  %104 = vst.msk [vmem:[%s3 + $0x58] sm:$0xff] %vm92, %v87
  %105 = vst.msk [vmem:[%s3 + $0x60] sm:$0xff] %vm92, %v88
  %106 = vst.msk [vmem:[%s3 + $0x68] sm:$0xff] %vm92, %v89
  %107 = vst.msk [vmem:[%s3 + $0x70] sm:$0xff] %vm92, %v90
  %108 = vst.msk [vmem:[%s3 + $0x78] sm:$0xff] %vm92, %v91
  // Predicated region
  $region14: #{down_forward.7} parent=0 // pred_check
    _
  $region15: #{down_forward.7} parent=0 // pred_check_branch
    %110 = sbr.rel (0) target = $region17
  $region16: #{down_forward.7} parent=0 // pred_region
    _
  $region17: #{down_forward.7} parent=0 // pred_fallthru
    _
  // Predicated region
  $region18: #{down_forward.7} parent=0 // pred_check
    _
  $region19: #{down_forward.7} parent=0 // pred_check_branch
    %112 = sbr.rel (0) target = $region21
  $region20: #{down_forward.7} parent=0 // pred_region
    _
  $region21: #{down_forward.7} parent=0 // pred_fallthru
    _

// kernel: down_forward.6
$region0: #{down_forward.6}
  #allocation0 [shape = 'u32[]', space=smem, size = 0x4, offset = 0x4, fixed_abs, tag = 'smem constant byte address 0x4 - core index']
  #allocation1 [shape = 'u32[144,128]{1,0:T(1,128)}', space=vmem, size = 0x12000, scoped, tag = 'internal scratch']
  #allocation2 [shape = 'f32[128,8]{1,0:T(8,128)}', space=vmem, size = 0x10000, scoped, tag = 'scratch operand']
  %s0 = inlined_call_operand.vmem [shape: bf16[128,72], index: 0, kind: input, shape index: {}]
  %s1 = inlined_call_operand.vmem [shape: bf16[72,8], index: 1, kind: input, shape index: {}]
  %s2 = inlined_call_operand.vmem [shape: f32[128,8], index: 2, kind: output, shape index: {0}]
  %s3 = inlined_call_operand.vmem [shape: f32[1,8], index: 3, kind: output, shape index: {1}]
  %s4 = inlined_call_operand.vmem [shape: f32[1,8], index: 4, kind: output, shape index: {2}]
  %5 = xla_tuple %s2, %s3, %s4
  %s6 = sld [smem:[#allocation0]]
  $region46: #{down_forward.6} parent=0
    _
  %s8 = ssub.s32 1, %s6
  %s9 = scalar_select 0, %s8, %s6
  // Predicated region
  $region2: #{down_forward.6} parent=0 // pred_check
    _
  $region3: #{down_forward.6} parent=0 // pred_check_branch
    %11 = sbr.rel (0) target = $region5
  $region4: #{down_forward.6} parent=0 // pred_region
    _
  $region5: #{down_forward.6} parent=0 // pred_fallthru
    _
  // Predicated region
  $region6: #{down_forward.6} parent=0 // pred_check
    _
  $region7: #{down_forward.6} parent=0 // pred_check_branch
    %13 = sbr.rel (0) target = $region9
  $region8: #{down_forward.6} parent=0 // pred_region
    _
  $region9: #{down_forward.6} parent=0 // pred_fallthru
    _
  %p15 = scmp.eq.s32.totalorder 0, 0
  %p16 = scmp.eq.s32.totalorder 0, 0
  %p17 = pnand %p15, %p16
  %p18 = pneg %p17
  // Predicated region
  $region10: #{down_forward.6} parent=0 // pred_check
    _
  $region11: #{down_forward.6} parent=0 // pred_check_branch
    %20 = sbr.rel (%p17) target = $region13
  $region12: #{down_forward.6} parent=0 // pred_region
    %vm21 = vcmask 57344
    %22 = vst.msk [vmem:[%s3] sm:$0x1] %vm21, 0.0
    %23 = vst.msk [vmem:[%s4] sm:$0x1] %vm21, 0.0
  $region13: #{down_forward.6} parent=0 // pred_fallthru
    _
  // Predicated region
  $region14: #{down_forward.6} parent=0 // pred_check
    %p24 = pneg %p16
  $region15: #{down_forward.6} parent=0 // pred_check_branch
    %26 = sbr.rel (%p24) target = $region17
  $region16: #{down_forward.6} parent=0 // pred_region
    %vm27 = vcmask 64512
    %28 = vst.msk [vmem:[#allocation2] sm:$0xff] %vm27, 0.0
    %29 = vst.msk [vmem:[#allocation2 + $0x8] sm:$0xff] %vm27, 0.0
    %30 = vst.msk [vmem:[#allocation2 + $0x10] sm:$0xff] %vm27, 0.0
    %31 = vst.msk [vmem:[#allocation2 + $0x18] sm:$0xff] %vm27, 0.0
    %32 = vst.msk [vmem:[#allocation2 + $0x20] sm:$0xff] %vm27, 0.0
    %33 = vst.msk [vmem:[#allocation2 + $0x28] sm:$0xff] %vm27, 0.0
    %34 = vst.msk [vmem:[#allocation2 + $0x30] sm:$0xff] %vm27, 0.0
    %35 = vst.msk [vmem:[#allocation2 + $0x38] sm:$0xff] %vm27, 0.0
    %36 = vst.msk [vmem:[#allocation2 + $0x40] sm:$0xff] %vm27, 0.0
    %37 = vst.msk [vmem:[#allocation2 + $0x48] sm:$0xff] %vm27, 0.0
    %38 = vst.msk [vmem:[#allocation2 + $0x50] sm:$0xff] %vm27, 0.0
    %39 = vst.msk [vmem:[#allocation2 + $0x58] sm:$0xff] %vm27, 0.0
    %40 = vst.msk [vmem:[#allocation2 + $0x60] sm:$0xff] %vm27, 0.0
    %41 = vst.msk [vmem:[#allocation2 + $0x68] sm:$0xff] %vm27, 0.0
    %42 = vst.msk [vmem:[#allocation2 + $0x70] sm:$0xff] %vm27, 0.0
    %43 = vst.msk [vmem:[#allocation2 + $0x78] sm:$0xff] %vm27, 0.0
  $region17: #{down_forward.6} parent=0 // pred_fallthru
    _
  %v44 = vld [vmem:[#allocation2] sm:$0xff]
  %v45 = vld [vmem:[#allocation2 + $0x8] sm:$0xff]
  %v46 = vld [vmem:[#allocation2 + $0x10] sm:$0xff]
  %v47 = vld [vmem:[#allocation2 + $0x18] sm:$0xff]
  %v48 = vld [vmem:[#allocation2 + $0x20] sm:$0xff]
  %v49 = vld [vmem:[#allocation2 + $0x28] sm:$0xff]
  %v50 = vld [vmem:[#allocation2 + $0x30] sm:$0xff]
  %v51 = vld [vmem:[#allocation2 + $0x38] sm:$0xff]
  %v52 = vld [vmem:[#allocation2 + $0x40] sm:$0xff]
  %v53 = vld [vmem:[#allocation2 + $0x48] sm:$0xff]
  %v54 = vld [vmem:[#allocation2 + $0x50] sm:$0xff]
  %v55 = vld [vmem:[#allocation2 + $0x58] sm:$0xff]
  %v56 = vld [vmem:[#allocation2 + $0x60] sm:$0xff]
  %v57 = vld [vmem:[#allocation2 + $0x68] sm:$0xff]
  %v58 = vld [vmem:[#allocation2 + $0x70] sm:$0xff]
  %v59 = vld [vmem:[#allocation2 + $0x78] sm:$0xff]
  %v60 = vld [vmem:[%s0] sm:$0xf]
  %v61 = vld [vmem:[%s0 + $0x4] sm:$0xf]
  %v62 = vld [vmem:[%s0 + $0x8] sm:$0xf]
  %v63 = vld [vmem:[%s0 + $0xc] sm:$0xf]
  %v64 = vld [vmem:[%s0 + $0x10] sm:$0xf]
  %v65 = vld [vmem:[%s0 + $0x14] sm:$0xf]
  %v66 = vld [vmem:[%s0 + $0x18] sm:$0xf]
  %v67 = vld [vmem:[%s0 + $0x1c] sm:$0xf]
  %v68 = vld [vmem:[%s0 + $0x20] sm:$0xf]
  %v69 = vld [vmem:[%s0 + $0x24] sm:$0xf]
  %v70 = vld [vmem:[%s0 + $0x28] sm:$0xf]
  %v71 = vld [vmem:[%s0 + $0x2c] sm:$0xf]
  %v72 = vld [vmem:[%s0 + $0x30] sm:$0xf]
  %v73 = vld [vmem:[%s0 + $0x34] sm:$0xf]
  %v74 = vld [vmem:[%s0 + $0x38] sm:$0xf]
  %v75 = vld [vmem:[%s0 + $0x3c] sm:$0xf]
  %v76 = vld [vmem:[%s1] sm:$0xf]
  %v77 = vld [vmem:[%s1 + $0x4] sm:$0xf]
  %v78 = vld [vmem:[%s1 + $0x8] sm:$0xf]
  %v79 = vld [vmem:[%s1 + $0xc] sm:$0xf]
  %v80 = vld [vmem:[%s1 + $0x10] sm:$0xf]
  %v81 = vld [vmem:[%s1 + $0x14] sm:$0xf]
  %v82 = vld [vmem:[%s1 + $0x18] sm:$0xf]
  %v83 = vld [vmem:[%s1 + $0x1c] sm:$0xf]
  %v84 = vld [vmem:[%s1 + $0x20] sm:$0xf]
  %v101 = vunpack.c.l.b16 %v60
  %v102 = vunpack.c.l.b16 %v61
  %v103 = vunpack.c.l.b16 %v62
  %v104 = vunpack.c.l.b16 %v63
  %v105 = vunpack.c.l.b16 %v64
  %v106 = vunpack.c.l.b16 %v65
  %v107 = vunpack.c.l.b16 %v66
  %v108 = vunpack.c.l.b16 %v67
  %v109 = vunpack.c.l.b16 %v68
  %v110 = vunpack.c.l.b16 %v69
  %v111 = vunpack.c.l.b16 %v70
  %v112 = vunpack.c.l.b16 %v71
  %v113 = vunpack.c.l.b16 %v72
  %v114 = vunpack.c.l.b16 %v73
  %v115 = vunpack.c.l.b16 %v74
  %v116 = vunpack.c.l.b16 %v75
  %v117 = vpack.c.b16 %v102, %v101
  %v118 = vpack.c.b16 %v104, %v103
  %v119 = vpack.c.b16 %v106, %v105
  %v120 = vpack.c.b16 %v108, %v107
  %v121 = vpack.c.b16 %v110, %v109
  %v122 = vpack.c.b16 %v112, %v111
  %v123 = vpack.c.b16 %v114, %v113
  %v124 = vpack.c.b16 %v116, %v115
  %v134 = vunpack.c.l.b16 %v76
  %v135 = vunpack.c.l.b16 %v77
  %v136 = vunpack.c.l.b16 %v78
  %v137 = vunpack.c.l.b16 %v79
  %v138 = vunpack.c.l.b16 %v80
  %v139 = vunpack.c.l.b16 %v81
  %v140 = vunpack.c.l.b16 %v82
  %v141 = vunpack.c.l.b16 %v83
  %v142 = vunpack.c.l.b16 %v84
  %v143 = vpack.c.b16 %v135, %v134
  %v144 = vpack.c.b16 %v137, %v136
  %v145 = vpack.c.b16 %v139, %v138
  %v146 = vpack.c.b16 %v141, %v140
  %v147 = vpack.c.b16 %v142, %v142
  %vm152 = vcmask 588800
  %v154 = vsel %vm152, %v117, 0
  %v157 = vsel %vm152, %v118, 0
  %v160 = vsel %vm152, %v119, 0
  %v163 = vsel %vm152, %v120, 0
  %v166 = vsel %vm152, %v121, 0
  %v169 = vsel %vm152, %v122, 0
  %v172 = vsel %vm152, %v123, 0
  %v175 = vsel %vm152, %v124, 0
  %vm177 = vcmask 1043456
  %v179 = vsel %vm177, %v147, 0
  %181 = vmatprep.subr.bf16.mxu0 0
  %182 = vmatpush1.bf16.msra.mxu0 %v143
  %183 = vmatprep.subr.bf16.mxu0 0
  %184 = vmatpush1.bf16.msra.mxu0 %v144
  %185 = vmatprep.subr.bf16.mxu0 0
  %186 = vmatpush1.bf16.msra.mxu0 %v145
  %187 = vmatprep.subr.bf16.mxu0 0
  %188 = vmatpush1.bf16.msra.mxu0 %v146
  %189 = vmatprep.subr.bf16.mxu0 0
  %190 = vmatpush1.bf16.msra.mxu0 %v179
  %191 = vmatprep.subr.bf16.mxu0 0
  %192 = vmatpush1.bf16.msra.mxu0 0
  %193 = vmatprep.subr.bf16.mxu0 0
  %194 = vmatpush1.bf16.msra.mxu0 0
  %195 = vmatprep.subr.bf16.mxu0 0
  %196 = vmatpush1.bf16.msra.mxu0 0
  %197 = vmatprep.subr.bf16.mxu0 0
  %198 = vmatpush1.bf16.msra.mxu0 0
  %199 = vmatprep.subr.bf16.mxu0 0
  %200 = vmatpush1.bf16.msra.mxu0 0
  %201 = vmatprep.subr.bf16.mxu0 0
  %202 = vmatpush1.bf16.msra.mxu0 0
  %203 = vmatprep.subr.bf16.mxu0 0
  %204 = vmatpush1.bf16.msra.mxu0 0
  %205 = vmatprep.subr.bf16.mxu0 0
  %206 = vmatpush1.bf16.msra.mxu0 0
  %207 = vmatprep.subr.bf16.mxu0 0
  %208 = vmatpush1.bf16.msra.mxu0 0
  %209 = vmatprep.subr.bf16.mxu0 0
  %210 = vmatpush1.bf16.msra.mxu0 0
  %211 = vmatprep.subr.bf16.mxu0 0
  %212 = vmatpush1.bf16.msra.mxu0 0
  %213 = vmatprep.mubr.bf16.mxu0 0
  %214 = vmatmul.mubr.bf16.gmra.mrb[0].mxu0 %v154
  %v215 = vpop.f32.mrb[0].mxu0
  %v216 = vadd.f32 0.0, %v215
  %v217 = vpop.f32.mrb[0].mxu0
  %v218 = vpop.f32.mrb[0].mxu0
  %v219 = vadd.f32 0.0, %v218
  %v220 = vpop.f32.mrb[0].mxu0
  %221 = vmatprep.mubr.bf16.mxu0 0
  %222 = vmatmul.mubr.bf16.gmra.mrb[0].mxu0 %v157
  %v223 = vpop.f32.mrb[0].mxu0
  %v224 = vadd.f32 0.0, %v223
  %v225 = vpop.f32.mrb[0].mxu0
  %v226 = vpop.f32.mrb[0].mxu0
  %v227 = vadd.f32 0.0, %v226
  %v228 = vpop.f32.mrb[0].mxu0
  %229 = vmatprep.mubr.bf16.mxu0 0
  %230 = vmatmul.mubr.bf16.gmra.mrb[0].mxu0 %v160
  %v231 = vpop.f32.mrb[0].mxu0
  %v232 = vadd.f32 0.0, %v231
  %v233 = vpop.f32.mrb[0].mxu0
  %v234 = vpop.f32.mrb[0].mxu0
  %v235 = vadd.f32 0.0, %v234
  %v236 = vpop.f32.mrb[0].mxu0
  %237 = vmatprep.mubr.bf16.mxu0 0
  %238 = vmatmul.mubr.bf16.gmra.mrb[0].mxu0 %v163
  %v239 = vpop.f32.mrb[0].mxu0
  %v240 = vadd.f32 0.0, %v239
  %v241 = vpop.f32.mrb[0].mxu0
  %v242 = vpop.f32.mrb[0].mxu0
  %v243 = vadd.f32 0.0, %v242
  %v244 = vpop.f32.mrb[0].mxu0
  %245 = vmatprep.mubr.bf16.mxu0 0
  %246 = vmatmul.mubr.bf16.gmra.mrb[0].mxu0 %v166
  %v247 = vpop.f32.mrb[0].mxu0
  %v248 = vadd.f32 0.0, %v247
  %v249 = vpop.f32.mrb[0].mxu0
  %v250 = vpop.f32.mrb[0].mxu0
  %v251 = vadd.f32 0.0, %v250
  %v252 = vpop.f32.mrb[0].mxu0
  %253 = vmatprep.mubr.bf16.mxu0 0
  %254 = vmatmul.mubr.bf16.gmra.mrb[0].mxu0 %v169
  %v255 = vpop.f32.mrb[0].mxu0
  %v256 = vadd.f32 0.0, %v255
  %v257 = vpop.f32.mrb[0].mxu0
  %v258 = vpop.f32.mrb[0].mxu0
  %v259 = vadd.f32 0.0, %v258
  %v260 = vpop.f32.mrb[0].mxu0
  %261 = vmatprep.mubr.bf16.mxu0 0
  %262 = vmatmul.mubr.bf16.gmra.mrb[0].mxu0 %v172
  %v263 = vpop.f32.mrb[0].mxu0
  %v264 = vadd.f32 0.0, %v263
  %v265 = vpop.f32.mrb[0].mxu0
  %v266 = vpop.f32.mrb[0].mxu0
  %v267 = vadd.f32 0.0, %v266
  %v268 = vpop.f32.mrb[0].mxu0
  %269 = vmatprep.mubr.bf16.mxu0 0
  %270 = vmatmul.mubr.bf16.gmra.mrb[0].mxu0 %v175
  %v271 = vpop.f32.mrb[0].mxu0
  %v272 = vadd.f32 0.0, %v271
  %v273 = vpop.f32.mrb[0].mxu0
  %v274 = vpop.f32.mrb[0].mxu0
  %v275 = vadd.f32 0.0, %v274
  %v276 = vpop.f32.mrb[0].mxu0
  %277 = vdwg.mxu0
  %v278 = vadd.f32 %v44, %v216
  %v279 = vadd.f32 %v45, %v219
  %v280 = vadd.f32 %v46, %v224
  %v281 = vadd.f32 %v47, %v227
  %v282 = vadd.f32 %v48, %v232
  %v283 = vadd.f32 %v49, %v235
  %v284 = vadd.f32 %v50, %v240
  %v285 = vadd.f32 %v51, %v243
  %v286 = vadd.f32 %v52, %v248
  %v287 = vadd.f32 %v53, %v251
  %v288 = vadd.f32 %v54, %v256
  %v289 = vadd.f32 %v55, %v259
  %v290 = vadd.f32 %v56, %v264
  %v291 = vadd.f32 %v57, %v267
  %v292 = vadd.f32 %v58, %v272
  %v293 = vadd.f32 %v59, %v275
  %vm294 = vcmask 64512
  %295 = vst.msk [vmem:[#allocation2] sm:$0xff] %vm294, %v278
  %296 = vst.msk [vmem:[#allocation2 + $0x8] sm:$0xff] %vm294, %v279
  %297 = vst.msk [vmem:[#allocation2 + $0x10] sm:$0xff] %vm294, %v280
  %298 = vst.msk [vmem:[#allocation2 + $0x18] sm:$0xff] %vm294, %v281
  %299 = vst.msk [vmem:[#allocation2 + $0x20] sm:$0xff] %vm294, %v282
  %300 = vst.msk [vmem:[#allocation2 + $0x28] sm:$0xff] %vm294, %v283
  %301 = vst.msk [vmem:[#allocation2 + $0x30] sm:$0xff] %vm294, %v284
  %302 = vst.msk [vmem:[#allocation2 + $0x38] sm:$0xff] %vm294, %v285
  %303 = vst.msk [vmem:[#allocation2 + $0x40] sm:$0xff] %vm294, %v286
  %304 = vst.msk [vmem:[#allocation2 + $0x48] sm:$0xff] %vm294, %v287
  %305 = vst.msk [vmem:[#allocation2 + $0x50] sm:$0xff] %vm294, %v288
  %306 = vst.msk [vmem:[#allocation2 + $0x58] sm:$0xff] %vm294, %v289
  %307 = vst.msk [vmem:[#allocation2 + $0x60] sm:$0xff] %vm294, %v290
  %308 = vst.msk [vmem:[#allocation2 + $0x68] sm:$0xff] %vm294, %v291
  %309 = vst.msk [vmem:[#allocation2 + $0x70] sm:$0xff] %vm294, %v292
  %310 = vst.msk [vmem:[#allocation2 + $0x78] sm:$0xff] %vm294, %v293
  // Predicated region
  $region18: #{down_forward.6} parent=0 // pred_check
    %p311 = pneg %p16
  $region19: #{down_forward.6} parent=0 // pred_check_branch
    %313 = sbr.rel (%p311) target = $region21
  $region20: #{down_forward.6} parent=0 // pred_region
    %v314 = vld [vmem:[#allocation2] sm:$0xff]
    %v315 = vld [vmem:[#allocation2 + $0x8] sm:$0xff]
    %v316 = vld [vmem:[#allocation2 + $0x10] sm:$0xff]
    %v317 = vld [vmem:[#allocation2 + $0x18] sm:$0xff]
    %v318 = vld [vmem:[#allocation2 + $0x20] sm:$0xff]
    %v319 = vld [vmem:[#allocation2 + $0x28] sm:$0xff]
    %v320 = vld [vmem:[#allocation2 + $0x30] sm:$0xff]
    %v321 = vld [vmem:[#allocation2 + $0x38] sm:$0xff]
    %v322 = vld [vmem:[#allocation2 + $0x40] sm:$0xff]
    %v323 = vld [vmem:[#allocation2 + $0x48] sm:$0xff]
    %v324 = vld [vmem:[#allocation2 + $0x50] sm:$0xff]
    %v325 = vld [vmem:[#allocation2 + $0x58] sm:$0xff]
    %v326 = vld [vmem:[#allocation2 + $0x60] sm:$0xff]
    %v327 = vld [vmem:[#allocation2 + $0x68] sm:$0xff]
    %v328 = vld [vmem:[#allocation2 + $0x70] sm:$0xff]
    %v329 = vld [vmem:[#allocation2 + $0x78] sm:$0xff]
    %330 = vst.msk [vmem:[%s2] sm:$0xff] %vm294, %v314
    %331 = vst.msk [vmem:[%s2 + $0x8] sm:$0xff] %vm294, %v315
    %332 = vst.msk [vmem:[%s2 + $0x10] sm:$0xff] %vm294, %v316
    %333 = vst.msk [vmem:[%s2 + $0x18] sm:$0xff] %vm294, %v317
    %334 = vst.msk [vmem:[%s2 + $0x20] sm:$0xff] %vm294, %v318
    %335 = vst.msk [vmem:[%s2 + $0x28] sm:$0xff] %vm294, %v319
    %336 = vst.msk [vmem:[%s2 + $0x30] sm:$0xff] %vm294, %v320
    %337 = vst.msk [vmem:[%s2 + $0x38] sm:$0xff] %vm294, %v321
    %338 = vst.msk [vmem:[%s2 + $0x40] sm:$0xff] %vm294, %v322
    %339 = vst.msk [vmem:[%s2 + $0x48] sm:$0xff] %vm294, %v323
    %340 = vst.msk [vmem:[%s2 + $0x50] sm:$0xff] %vm294, %v324
    %341 = vst.msk [vmem:[%s2 + $0x58] sm:$0xff] %vm294, %v325
    %342 = vst.msk [vmem:[%s2 + $0x60] sm:$0xff] %vm294, %v326
    %343 = vst.msk [vmem:[%s2 + $0x68] sm:$0xff] %vm294, %v327
    %344 = vst.msk [vmem:[%s2 + $0x70] sm:$0xff] %vm294, %v328
    %345 = vst.msk [vmem:[%s2 + $0x78] sm:$0xff] %vm294, %v329
    %v346 = vld [vmem:[%s3] sm:$0x1]
    %v347 = vsel %vm294, %v314, 0.0
    %v348 = vsel %vm294, %v315, 0.0
    %v349 = vadd.f32 %v347, %v348
    %v350 = vsel %vm294, %v316, 0.0
    %v351 = vadd.f32 %v349, %v350
    %v352 = vsel %vm294, %v317, 0.0
    %v353 = vadd.f32 %v351, %v352
    %v354 = vsel %vm294, %v318, 0.0
    %v355 = vadd.f32 %v353, %v354
    %v356 = vsel %vm294, %v319, 0.0
    %v357 = vadd.f32 %v355, %v356
    %v358 = vsel %vm294, %v320, 0.0
    %v359 = vadd.f32 %v357, %v358
    %v360 = vsel %vm294, %v321, 0.0
    %v361 = vadd.f32 %v359, %v360
    %v362 = vsel %vm294, %v322, 0.0
    %v363 = vadd.f32 %v361, %v362
    %v364 = vsel %vm294, %v323, 0.0
    %v365 = vadd.f32 %v363, %v364
    %v366 = vsel %vm294, %v324, 0.0
    %v367 = vadd.f32 %v365, %v366
    %v368 = vsel %vm294, %v325, 0.0
    %v369 = vadd.f32 %v367, %v368
    %v370 = vsel %vm294, %v326, 0.0
    %v371 = vadd.f32 %v369, %v370
    %v372 = vsel %vm294, %v327, 0.0
    %v373 = vadd.f32 %v371, %v372
    %v374 = vsel %vm294, %v328, 0.0
    %v375 = vadd.f32 %v373, %v374
    %v376 = vsel %vm294, %v329, 0.0
    %v377 = vadd.f32 %v375, %v376
    %v378 = vrot.slane %v377, 4
    %v379 = vadd.f32 %v377, %v378
    %v380 = vrot.slane %v379, 2
    %v381 = vadd.f32 %v379, %v380
    %v382 = vrot.slane %v381, 1
    %v383 = vadd.f32 %v381, %v382
    %v384 = vadd.f32 %v346, %v383
    %vm385 = vcmask 57344
    %386 = vst.msk [vmem:[%s3] sm:$0x1] %vm385, %v384
    %v387 = vld [vmem:[%s4] sm:$0x1]
    %v388 = vmul.f32 %v314, %v314
    %v389 = vmul.f32 %v315, %v315
    %v390 = vmul.f32 %v316, %v316
    %v391 = vmul.f32 %v317, %v317
    %v392 = vmul.f32 %v318, %v318
    %v393 = vmul.f32 %v319, %v319
    %v394 = vmul.f32 %v320, %v320
    %v395 = vmul.f32 %v321, %v321
    %v396 = vmul.f32 %v322, %v322
    %v397 = vmul.f32 %v323, %v323
    %v398 = vmul.f32 %v324, %v324
    %v399 = vmul.f32 %v325, %v325
    %v400 = vmul.f32 %v326, %v326
    %v401 = vmul.f32 %v327, %v327
    %v402 = vmul.f32 %v328, %v328
    %v403 = vmul.f32 %v329, %v329
    %v404 = vsel %vm294, %v388, 0.0
    %v405 = vsel %vm294, %v389, 0.0
    %v406 = vadd.f32 %v404, %v405
    %v407 = vsel %vm294, %v390, 0.0
    %v408 = vadd.f32 %v406, %v407
    %v409 = vsel %vm294, %v391, 0.0
    %v410 = vadd.f32 %v408, %v409
    %v411 = vsel %vm294, %v392, 0.0
    %v412 = vadd.f32 %v410, %v411
    %v413 = vsel %vm294, %v393, 0.0
    %v414 = vadd.f32 %v412, %v413
    %v415 = vsel %vm294, %v394, 0.0
    %v416 = vadd.f32 %v414, %v415
    %v417 = vsel %vm294, %v395, 0.0
    %v418 = vadd.f32 %v416, %v417
    %v419 = vsel %vm294, %v396, 0.0
    %v420 = vadd.f32 %v418, %v419
    %v421 = vsel %vm294, %v397, 0.0
    %v422 = vadd.f32 %v420, %v421
    %v423 = vsel %vm294, %v398, 0.0
    %v424 = vadd.f32 %v422, %v423
    %v425 = vsel %vm294, %v399, 0.0
    %v426 = vadd.f32 %v424, %v425
    %v427 = vsel %vm294, %v400, 0.0
    %v428 = vadd.f32 %v426, %v427
    %v429 = vsel %vm294, %v401, 0.0
    %v430 = vadd.f32 %v428, %v429
    %v431 = vsel %vm294, %v402, 0.0
    %v432 = vadd.f32 %v430, %v431
    %v433 = vsel %vm294, %v403, 0.0
    %v434 = vadd.f32 %v432, %v433
    %v435 = vrot.slane %v434, 4
    %v436 = vadd.f32 %v434, %v435
    %v437 = vrot.slane %v436, 2
    %v438 = vadd.f32 %v436, %v437
    %v439 = vrot.slane %v438, 1
    %v440 = vadd.f32 %v438, %v439
    %v441 = vadd.f32 %v387, %v440
    %442 = vst.msk [vmem:[%s4] sm:$0x1] %vm385, %v441
  $region21: #{down_forward.6} parent=0 // pred_fallthru
    _
  // Predicated region
  $region22: #{down_forward.6} parent=0 // pred_check
    _
  $region23: #{down_forward.6} parent=0 // pred_check_branch
    %444 = sbr.rel (0) target = $region25
  $region24: #{down_forward.6} parent=0 // pred_region
    _
  $region25: #{down_forward.6} parent=0 // pred_fallthru
    _
  // Predicated region
  $region26: #{down_forward.6} parent=0 // pred_check
    _
  $region27: #{down_forward.6} parent=0 // pred_check_branch
    %446 = sbr.rel (0) target = $region29
  $region28: #{down_forward.6} parent=0 // pred_region
    _
  $region29: #{down_forward.6} parent=0 // pred_fallthru
    _
  // Predicated region
  $region30: #{down_forward.6} parent=0 // pred_check
    _
  $region31: #{down_forward.6} parent=0 // pred_check_branch
    %448 = sbr.rel (0) target = $region33
  $region32: #{down_forward.6} parent=0 // pred_region
    _
  $region33: #{down_forward.6} parent=0 // pred_fallthru
    _
  // Predicated region
  $region34: #{down_forward.6} parent=0 // pred_check
    _
  $region35: #{down_forward.6} parent=0 // pred_check_branch
    %450 = sbr.rel (0) target = $region37
  $region36: #{down_forward.6} parent=0 // pred_region
    _
  $region37: #{down_forward.6} parent=0 // pred_fallthru
    _
  // Predicated region
  $region38: #{down_forward.6} parent=0 // pred_check
    _
  $region39: #{down_forward.6} parent=0 // pred_check_branch
    %452 = sbr.rel (0) target = $region41
  $region40: #{down_forward.6} parent=0 // pred_region
    _
  $region41: #{down_forward.6} parent=0 // pred_fallthru
    _
  // Predicated region
  $region42: #{down_forward.6} parent=0 // pred_check
    _
  $region43: #{down_forward.6} parent=0 // pred_check_branch
    %454 = sbr.rel (0) target = $region45
  $region44: #{down_forward.6} parent=0 // pred_region
    _
  $region45: #{down_forward.6} parent=0 // pred_fallthru
    _

</llo_original>
